<compile_context>
chip_gen: v5e
topology: v5e:2x2
jax: 0.10.0
libtpu: 0.0.40
codegen_flags: <defaults>
</compile_context>

<pallas_src>
import functools

import jax
import jax.numpy as jnp
import numpy as np
from jax import lax
from jax.experimental import pallas as pl
from jax.experimental.pallas import tpu as pltpu

_LANE = 128            # lane width (last-dim tiling)
_SUBLANE = 8           # sublane width (second-to-last dim tiling)
_MAX_TIME_BLOCK = 32   # timesteps per grid step
_MAX_BATCH_BLOCK = 128 # batch rows per grid step (MXU-filling when batch allows)


def _round_up(x, m):
    return ((x + m - 1) // m) * m


def _cdiv(a, b):
    return -(-a // b)


def _vmem_cap_bytes():
    """Generation-aware VMEM request cap (falls back to a v7x-safe constant)."""
    try:
        cap = int(pltpu.get_tpu_info().vmem_capacity_bytes)
        if cap > 0:
            return (cap * 3) // 4
    except Exception:
        pass
    return 48 * 2 ** 20   # fits v7x (64 MiB/TC) and v5e/v6e (128 MiB)


def _time_blocking(t, max_tb=_MAX_TIME_BLOCK):
    """Pick a time block TB and padded length nt*TB (minimal padding)."""
    nt = _cdiv(t, max_tb)
    tb = _cdiv(t, nt)
    return tb, nt * tb


def _lstm_layer_kernel(x_ref, wih_ref, whh_ref, b_ref, y_ref, h_ref, c_ref,
                       xw_ref, *, seq_len, mask_tail):
    """One (batch-block, time-block) tile of one LSTM layer.

    x_ref  : (TB, BB, Dp)  raw layer input (f32, time-major)
    wih_ref: (Dp, 4*Hp)    input->hidden weights (transposed), resident
    whh_ref: (Hp, 4*Hp)    hidden->hidden weights (transposed), resident
    b_ref  : (1, 4*Hp)     fused bias (b_ih + b_hh), f32
    y_ref  : (TB, BB, Hp)  per-step hidden outputs (f32)
    h_ref  : (BB, Hp)      hidden state; VMEM-resident carry across time grid
    c_ref  : (BB, Hp)      cell state;   VMEM-resident carry across time grid
    xw_ref : (TB, BB, 4Hp) VMEM scratch for the fused input projection
    """
    t_blk = pl.program_id(1)

    @pl.when(t_blk == 0)
    def _init():
        h_ref[...] = jnp.zeros_like(h_ref)
        c_ref[...] = jnp.zeros_like(c_ref)

    tb, bb, dp = x_ref.shape
    hp = h_ref.shape[-1]
    g = 4 * hp

    # Fused input projection for the whole block: one large MXU-friendly GEMM
    # (M = TB*BB) with fused bias, f32 accumulation, stored to VMEM scratch.
    wih = wih_ref[...]
    x2d = x_ref[...].reshape(tb * bb, dp).astype(wih.dtype)
    proj = jnp.dot(x2d, wih, preferred_element_type=jnp.float32) + b_ref[...]
    xw_ref[...] = proj.reshape(tb, bb, g)

    whh = whh_ref[...]                      # resident recurrent weights

    def step(i, carry):
        h, c = carry
        # Only the recurrent matmul stays on the sequential critical path.
        gates = xw_ref[i] + jnp.dot(h.astype(whh.dtype), whh,
                                    preferred_element_type=jnp.float32)
        # PyTorch gate order: i, f, g, o.  Hp is a multiple of 128, so these
        # are full-vreg lane-aligned slices.
        i_g = jax.nn.sigmoid(gates[:, 0 * hp:1 * hp])
        f_g = jax.nn.sigmoid(gates[:, 1 * hp:2 * hp])
        g_g = jnp.tanh(gates[:, 2 * hp:3 * hp])
        o_g = jax.nn.sigmoid(gates[:, 3 * hp:4 * hp])
        c_new = f_g * c + i_g * g_g
        h_new = o_g * jnp.tanh(c_new)
        y_ref[i] = h_new.astype(y_ref.dtype)
        if mask_tail:
            # Padded tail timesteps must not advance the h/c carries.
            valid = (t_blk * tb + i) < seq_len
            h_new = jnp.where(valid, h_new, h)
            c_new = jnp.where(valid, c_new, c)
        return h_new, c_new

    h_fin, c_fin = lax.fori_loop(0, tb, step, (h_ref[...], c_ref[...]),
                                 unroll=min(tb, 8))
    # Single carry store per time block.
    h_ref[...] = h_fin
    c_ref[...] = c_fin


def _lstm_layer(x, w_ih_t, w_hh_t, bias, *, seq_len, block_batch, time_block):
    """Full sequential scan of one LSTM layer.

    x: (Tp, Bp, Dp) f32 time-major (time already padded to a TB multiple).
    Returns y (Tp, Bp, Hp) f32, h_n (Bp, Hp) f32, c_n (Bp, Hp) f32.
    """
    Tp, Bp, Dp = x.shape
    Hp = w_hh_t.shape[0]
    G = 4 * Hp
    BB = block_batch
    TB = time_block
    nb = Bp // BB
    nt = Tp // TB
    mask_tail = Tp > seq_len

    w_bytes = jnp.dtype(w_hh_t.dtype).itemsize
    est = ((Dp + Hp) * G * w_bytes * 2       # resident weights (double-buffered)
           + G * 4 * 2                       # bias
           + TB * BB * Dp * 4 * 2            # x tile (double-buffered)
           + TB * BB * Hp * 4 * 2            # y tile (double-buffered)
           + TB * BB * G * 4                 # xw scratch
           + 4 * BB * Hp * 4 * 2)            # h/c carries
    vmem_limit = int(min(_vmem_cap_bytes(), max(32 * 2 ** 20, int(est * 1.3))))

    kernel = functools.partial(_lstm_layer_kernel, seq_len=seq_len,
                               mask_tail=mask_tail)

    grid_spec = pltpu.PrefetchScalarGridSpec(
        num_scalar_prefetch=0,
        grid=(nb, nt),                                   # batch blocks x time
        in_specs=[
            pl.BlockSpec((TB, BB, Dp), lambda b, t: (t, b, 0)),   # x tile
            pl.BlockSpec((Dp, G), lambda b, t: (0, 0)),           # W_ih^T
            pl.BlockSpec((Hp, G), lambda b, t: (0, 0)),           # W_hh^T
            pl.BlockSpec((1, G), lambda b, t: (0, 0)),            # fused bias
        ],
        out_specs=[
            pl.BlockSpec((TB, BB, Hp), lambda b, t: (t, b, 0)),   # y tile
            pl.BlockSpec((BB, Hp), lambda b, t: (b, 0)),          # h carry
            pl.BlockSpec((BB, Hp), lambda b, t: (b, 0)),          # c carry
        ],
        scratch_shapes=[pltpu.VMEM((TB, BB, G), jnp.float32)],
    )

    return pl.pallas_call(
        kernel,
        grid_spec=grid_spec,
        out_shape=(
            jax.ShapeDtypeStruct((Tp, Bp, Hp), jnp.float32),
            jax.ShapeDtypeStruct((Bp, Hp), jnp.float32),
            jax.ShapeDtypeStruct((Bp, Hp), jnp.float32),
        ),
        compiler_params=pltpu.CompilerParams(
            dimension_semantics=("parallel", "arbitrary"),
            vmem_limit_bytes=vmem_limit,
        ),
    )(x, w_ih_t, w_hh_t, bias)


def init_encoder_params(key, d_model, num_layers):
    """Deterministic init matching nn.LSTM parameter shapes:
    per layer: W_ih (4H, D_in), W_hh (4H, H), b_ih (4H,), b_hh (4H,),
    uniform(-1/sqrt(H), 1/sqrt(H))."""
    H = d_model
    bound = 1.0 / np.sqrt(H)
    params = []
    for _ in range(num_layers):
        d_in = d_model                  # input_size == hidden_size == d_model
        key, k1, k2, k3, k4 = jax.random.split(key, 5)
        w_ih = jax.random.uniform(k1, (4 * H, d_in), jnp.float32, -bound, bound)
        w_hh = jax.random.uniform(k2, (4 * H, H), jnp.float32, -bound, bound)
        b_ih = jax.random.uniform(k3, (4 * H,), jnp.float32, -bound, bound)
        b_hh = jax.random.uniform(k4, (4 * H,), jnp.float32, -bound, bound)
        params.append((w_ih, w_hh, b_ih, b_hh))
    return params


def _pad_gate_blocks(w, h, hp):
    """(4H, D) -> (4Hp, Dp), padding each of the i/f/g/o blocks independently
    with exact zeros (keeps padded hidden units identically zero)."""
    _, d = w.shape
    dp = _round_up(d, _LANE)
    w4 = w.reshape(4, h, d)
    w4 = jnp.pad(w4, ((0, 0), (0, hp - h), (0, dp - d)))
    return w4.reshape(4 * hp, dp)


def _pad_gate_vector(b, h, hp):
    b4 = b.reshape(4, h)
    b4 = jnp.pad(b4, ((0, 0), (0, hp - h)))
    return b4.reshape(4 * hp)


def prepare_encoder_params(params, compute_dtype=jnp.bfloat16):
    """One-time parameter prep: transpose, gate-aware lane padding, bias fusion,
    optional (default) bf16 cast of the MXU weight operands.  Call once."""
    prepared = []
    for (w_ih, w_hh, b_ih, b_hh) in params:
        h = w_hh.shape[1]
        hp = _round_up(h, _LANE)
        w_ih_p = _pad_gate_blocks(w_ih, h, hp)           # (4Hp, Dp)
        w_hh_p = _pad_gate_blocks(w_hh, h, hp)           # (4Hp, Hp)
        bias_p = _pad_gate_vector(b_ih + b_hh, h, hp)    # (4Hp,)
        prepared.append((
            jnp.transpose(w_ih_p).astype(compute_dtype),      # (Dp, 4Hp)
            jnp.transpose(w_hh_p).astype(compute_dtype),      # (Hp, 4Hp)
            bias_p.reshape(1, 4 * hp).astype(jnp.float32),    # (1, 4Hp)
        ))
    return prepared


@functools.partial(jax.jit, static_argnums=(2, 3))
def encoder_forward(x, prepared_params, d_model, output_hidden=True):
    """Equivalent of Encoder.forward.

    x: (B, T, d_model) batch-first, like the PyTorch module.
    Returns (lstm_out (B, T, d_model), (h_n, c_n)) with h_n, c_n of shape
    (num_layers, B, d_model), matching nn.LSTM.
    """
    B, T, D = x.shape
    H = d_model
    Hp = _round_up(H, _LANE)
    BB = min(_round_up(B, _SUBLANE), _MAX_BATCH_BLOCK)
    Bp = _round_up(B, BB)
    TB, Tp = _time_blocking(T)

    # Time-major activations between layers: (Tp, Bp, Hp) f32.  Padded batch
    # rows / feature lanes / tail timesteps are exact zeros and are sliced off
    # (tail steps are additionally masked inside the kernel for h/c).
    x_tm = jnp.transpose(x.astype(jnp.float32), (1, 0, 2))
    x_tm = jnp.pad(x_tm, ((0, Tp - T), (0, Bp - B), (0, Hp - D)))

    hs, cs = [], []
    layer_in = x_tm
    for (w_ih_t, w_hh_t, bias) in prepared_params:
        y, h_n, c_n = _lstm_layer(layer_in, w_ih_t, w_hh_t, bias,
                                  seq_len=T, block_batch=BB, time_block=TB)
        hs.append(h_n[:B, :H].astype(x.dtype))
        cs.append(c_n[:B, :H].astype(x.dtype))
        layer_in = y

    lstm_out = jnp.transpose(layer_in[:T, :B, :H], (1, 0, 2)).astype(x.dtype)
    hidden = (jnp.stack(hs, axis=0), jnp.stack(cs, axis=0))
    if output_hidden:
        return lstm_out, hidden
    return lstm_out, None


def _reference_forward(x, params):
    """Pure-JAX LSTM reference (lax.scan) for validation."""
    x_tm = jnp.transpose(x, (1, 0, 2))
    hs, cs = [], []
    layer_in = x_tm
    for (w_ih, w_hh, b_ih, b_hh) in params:
        H = w_hh.shape[1]
        b = b_ih + b_hh

        def step(carry, x_t):
            h, c = carry
            g = x_t @ w_ih.T + h @ w_hh.T + b
            i = jax.nn.sigmoid(g[:, 0 * H:1 * H])
            f = jax.nn.sigmoid(g[:, 1 * H:2 * H])
            gg = jnp.tanh(g[:, 2 * H:3 * H])
            o = jax.nn.sigmoid(g[:, 3 * H:4 * H])
            c_new = f * c + i * gg
            h_new = o * jnp.tanh(c_new)
            return (h_new, c_new), h_new

        B = x.shape[0]
        init = (jnp.zeros((B, H), jnp.float32), jnp.zeros((B, H), jnp.float32))
        (h_n, c_n), ys = lax.scan(step, init, layer_in)
        hs.append(h_n)
        cs.append(c_n)
        layer_in = ys
    return jnp.transpose(layer_in, (1, 0, 2)), (jnp.stack(hs), jnp.stack(cs))


if __name__ == "__main__":
    B, T, d_model, num_layers = 2, 8, 32, 2

    key = jax.random.PRNGKey(0)
    key, kx = jax.random.split(key)
    x = jax.random.normal(kx, (B, T, d_model), jnp.float32)

    params = init_encoder_params(key, d_model, num_layers)

    # f32 weight path: checked against a pure-JAX lax.scan reference.
    prepared_f32 = prepare_encoder_params(params, compute_dtype=jnp.float32)
    lstm_out, (h_n, c_n) = encoder_forward(x, prepared_f32, d_model, True)
    jax.block_until_ready((lstm_out, h_n, c_n))

    ref_out, (ref_h, ref_c) = _reference_forward(x, params)
    np.testing.assert_allclose(np.asarray(lstm_out), np.asarray(ref_out),
                               rtol=1e-5, atol=1e-5)
    np.testing.assert_allclose(np.asarray(h_n), np.asarray(ref_h),
                               rtol=1e-5, atol=1e-5)
    np.testing.assert_allclose(np.asarray(c_n), np.asarray(ref_c),
                               rtol=1e-5, atol=1e-5)

    assert lstm_out.shape == (B, T, d_model)
    assert h_n.shape == (num_layers, B, d_model)
    assert c_n.shape == (num_layers, B, d_model)

    # bf16 weight path (the recommended default on v6e/v7x): only exercised on
    # a real TPU backend — CPU/interpret executors reject bf16xbf16->f32 dots.
    if jax.default_backend() == "tpu":
        prepared_bf16 = prepare_encoder_params(params)   # default bf16 weights
        out_bf16, (h_bf16, c_bf16) = encoder_forward(x, prepared_bf16,
                                                     d_model, True)
        jax.block_until_ready((out_bf16, h_bf16, c_bf16))
        assert out_bf16.shape == lstm_out.shape
        assert bool(jnp.all(jnp.isfinite(out_bf16.astype(jnp.float32))))

    print("KERNEL_OK")
</pallas_src>

<mosaic_0001>
module attributes {stable_mosaic.version = 11 : i64} {
  func.func @_lstm_layer_kernel(%arg0: i32, %arg1: i32, %arg2: memref<8x8x128xf32, #tpu.memory_space<vmem>>, %arg3: memref<128x512xf32, #tpu.memory_space<vmem>>, %arg4: memref<128x512xf32, #tpu.memory_space<vmem>>, %arg5: memref<1x512xf32, #tpu.memory_space<vmem>>, %arg6: memref<8x8x128xf32, #tpu.memory_space<vmem>>, %arg7: memref<8x128xf32, #tpu.memory_space<vmem>>, %arg8: memref<8x128xf32, #tpu.memory_space<vmem>>, %arg9: memref<8x8x512xf32, #tpu.memory_space<vmem>>) attributes {dimension_semantics = [#tpu.dimension_semantics<parallel>, #tpu.dimension_semantics<arbitrary>], iteration_bounds = array<i64: 1, 1>, scalar_prefetch = 0 : i64, scratch_operands = 1 : i64, tpu.core_type = #tpu.core_type<tc>, window_params = [{transform_indices = @transform_0, window_bounds = array<i64: 8, 8, 128>}, {pipeline_mode = #tpu.pipeline_mode<synchronous>, transform_indices = @transform_1, window_bounds = array<i64: 128, 512>}, {pipeline_mode = #tpu.pipeline_mode<synchronous>, transform_indices = @transform_2, window_bounds = array<i64: 128, 512>}, {pipeline_mode = #tpu.pipeline_mode<synchronous>, transform_indices = @transform_3, window_bounds = array<i64: 1, 512>}, {transform_indices = @transform_4, window_bounds = array<i64: 8, 8, 128>}, {transform_indices = @transform_5, window_bounds = array<i64: 8, 128>}, {transform_indices = @transform_6, window_bounds = array<i64: 8, 128>}]} {
    %c0_i32 = arith.constant 0 : i32
    %0 = arith.cmpi eq, %arg1, %c0_i32 : i32
    %1 = arith.extui %0 : i1 to i32
    %c0_i32_0 = arith.constant 0 : i32
    %2 = arith.cmpi ne, %1, %c0_i32_0 : i32
    scf.if %2 {
      %cst_85 = arith.constant 0.000000e+00 : f32
      %289 = vector.broadcast %cst_85 : f32 to vector<8x128xf32>
      %c0_86 = arith.constant 0 : index
      %c0_87 = arith.constant 0 : index
      %290 = vector.load %arg7[%c0_86, %c0_87] : memref<8x128xf32, #tpu.memory_space<vmem>>, vector<8x128xf32>
      tpu.vector_store %arg7[%c0_86, %c0_87], %289 {strides = array<i32>} : memref<8x128xf32, #tpu.memory_space<vmem>>, vector<8x128xf32>,
      %cst_88 = arith.constant 0.000000e+00 : f32
      %291 = vector.broadcast %cst_88 : f32 to vector<8x128xf32>
      %c0_89 = arith.constant 0 : index
      %c0_90 = arith.constant 0 : index
      %292 = vector.load %arg8[%c0_89, %c0_90] : memref<8x128xf32, #tpu.memory_space<vmem>>, vector<8x128xf32>
      tpu.vector_store %arg8[%c0_89, %c0_90], %291 {strides = array<i32>} : memref<8x128xf32, #tpu.memory_space<vmem>>, vector<8x128xf32>,
    } else {
    }
    %c0 = arith.constant 0 : index
    %c0_1 = arith.constant 0 : index
    %3 = vector.load %arg3[%c0, %c0_1] : memref<128x512xf32, #tpu.memory_space<vmem>>, vector<128x512xf32>
    %c0_2 = arith.constant 0 : index
    %c0_3 = arith.constant 0 : index
    %c0_4 = arith.constant 0 : index
    %4 = vector.load %arg2[%c0_2, %c0_3, %c0_4] : memref<8x8x128xf32, #tpu.memory_space<vmem>>, vector<8x8x128xf32>
    %5 = vector.shape_cast %4 : vector<8x8x128xf32> to vector<64x128xf32>
    %cst = arith.constant dense<0.000000e+00> : vector<64x512xf32>
    %6 = tpu.matmul %5, %3, %cst {dimension_numbers = #tpu.dot_dimension_numbers<[1], [0], [0], [1], [0, 0, 1, 1], [], []>} : vector<64x128xf32>, vector<128x512xf32>, vector<64x512xf32> -> vector<64x512xf32>
    %c0_5 = arith.constant 0 : index
    %c0_6 = arith.constant 0 : index
    %7 = vector.load %arg5[%c0_5, %c0_6] : memref<1x512xf32, #tpu.memory_space<vmem>>, vector<1x512xf32>
    %8 = vector.broadcast %7 : vector<1x512xf32> to vector<64x512xf32>
    %9 = arith.addf %6, %8 : vector<64x512xf32>
    %10 = vector.shape_cast %9 : vector<64x512xf32> to vector<8x8x512xf32>
    %c0_7 = arith.constant 0 : index
    %c0_8 = arith.constant 0 : index
    %c0_9 = arith.constant 0 : index
    %11 = vector.load %arg9[%c0_7, %c0_8, %c0_9] : memref<8x8x512xf32, #tpu.memory_space<vmem>>, vector<8x8x512xf32>
    tpu.vector_store %arg9[%c0_7, %c0_8, %c0_9], %10 {strides = array<i32>} : memref<8x8x512xf32, #tpu.memory_space<vmem>>, vector<8x8x512xf32>,
    %c0_10 = arith.constant 0 : index
    %c0_11 = arith.constant 0 : index
    %12 = vector.load %arg4[%c0_10, %c0_11] : memref<128x512xf32, #tpu.memory_space<vmem>>, vector<128x512xf32>
    %c0_12 = arith.constant 0 : index
    %c0_13 = arith.constant 0 : index
    %13 = vector.load %arg7[%c0_12, %c0_13] : memref<8x128xf32, #tpu.memory_space<vmem>>, vector<8x128xf32>
    %c0_14 = arith.constant 0 : index
    %c0_15 = arith.constant 0 : index
    %14 = vector.load %arg8[%c0_14, %c0_15] : memref<8x128xf32, #tpu.memory_space<vmem>>, vector<8x128xf32>
    %c0_i32_16 = arith.constant 0 : i32
    %15 = arith.index_cast %c0_i32_16 : i32 to index
    %c0_17 = arith.constant 0 : index
    %c0_18 = arith.constant 0 : index
    %16 = vector.load %arg9[%15, %c0_17, %c0_18] : memref<8x8x512xf32, #tpu.memory_space<vmem>>, vector<1x8x512xf32>
    %17 = vector.shape_cast %16 : vector<1x8x512xf32> to vector<8x512xf32>
    %cst_19 = arith.constant dense<0.000000e+00> : vector<8x512xf32>
    %18 = tpu.matmul %13, %12, %cst_19 {dimension_numbers = #tpu.dot_dimension_numbers<[1], [0], [0], [1], [0, 0, 1, 1], [], []>} : vector<8x128xf32>, vector<128x512xf32>, vector<8x512xf32> -> vector<8x512xf32>
    %19 = arith.addf %17, %18 : vector<8x512xf32>
    %20 = vector.extract_strided_slice %19 {offsets = [0, 0], sizes = [8, 128], strides = [1, 1]} : vector<8x512xf32> to vector<8x128xf32>
    %21 = arith.negf %20 : vector<8x128xf32>
    %22 = math.exp %21 : vector<8x128xf32>
    %cst_20 = arith.constant 1.000000e+00 : f32
    %23 = vector.broadcast %cst_20 : f32 to vector<8x128xf32>
    %24 = arith.addf %23, %22 : vector<8x128xf32>
    %25 = arith.divf %23, %24 : vector<8x128xf32>
    %26 = vector.extract_strided_slice %19 {offsets = [0, 128], sizes = [8, 128], strides = [1, 1]} : vector<8x512xf32> to vector<8x128xf32>
    %27 = arith.negf %26 : vector<8x128xf32>
    %28 = math.exp %27 : vector<8x128xf32>
    %cst_21 = arith.constant 1.000000e+00 : f32
    %29 = vector.broadcast %cst_21 : f32 to vector<8x128xf32>
    %30 = arith.addf %29, %28 : vector<8x128xf32>
    %31 = arith.divf %29, %30 : vector<8x128xf32>
    %32 = vector.extract_strided_slice %19 {offsets = [0, 256], sizes = [8, 128], strides = [1, 1]} : vector<8x512xf32> to vector<8x128xf32>
    %33 = math.tanh %32 : vector<8x128xf32>
    %34 = vector.extract_strided_slice %19 {offsets = [0, 384], sizes = [8, 128], strides = [1, 1]} : vector<8x512xf32> to vector<8x128xf32>
    %35 = arith.negf %34 : vector<8x128xf32>
    %36 = math.exp %35 : vector<8x128xf32>
    %cst_22 = arith.constant 1.000000e+00 : f32
    %37 = vector.broadcast %cst_22 : f32 to vector<8x128xf32>
    %38 = arith.addf %37, %36 : vector<8x128xf32>
    %39 = arith.divf %37, %38 : vector<8x128xf32>
    %40 = arith.mulf %31, %14 : vector<8x128xf32>
    %41 = arith.mulf %25, %33 : vector<8x128xf32>
    %42 = arith.addf %40, %41 : vector<8x128xf32>
    %43 = math.tanh %42 : vector<8x128xf32>
    %44 = arith.mulf %39, %43 : vector<8x128xf32>
    %45 = arith.index_cast %c0_i32_16 : i32 to index
    %c0_23 = arith.constant 0 : index
    %c0_24 = arith.constant 0 : index
    %46 = vector.load %arg6[%45, %c0_23, %c0_24] : memref<8x8x128xf32, #tpu.memory_space<vmem>>, vector<1x8x128xf32>
    %47 = vector.shape_cast %46 : vector<1x8x128xf32> to vector<8x128xf32>
    %48 = vector.shape_cast %44 : vector<8x128xf32> to vector<1x8x128xf32>
    tpu.vector_store %arg6[%45, %c0_23, %c0_24], %48 {strides = array<i32>} : memref<8x8x128xf32, #tpu.memory_space<vmem>>, vector<1x8x128xf32>,
    %c1_i32 = arith.constant 1 : i32
    %49 = arith.index_cast %c1_i32 : i32 to index
    %c0_25 = arith.constant 0 : index
    %c0_26 = arith.constant 0 : index
    %50 = vector.load %arg9[%49, %c0_25, %c0_26] : memref<8x8x512xf32, #tpu.memory_space<vmem>>, vector<1x8x512xf32>
    %51 = vector.shape_cast %50 : vector<1x8x512xf32> to vector<8x512xf32>
    %cst_27 = arith.constant dense<0.000000e+00> : vector<8x512xf32>
    %52 = tpu.matmul %44, %12, %cst_27 {dimension_numbers = #tpu.dot_dimension_numbers<[1], [0], [0], [1], [0, 0, 1, 1], [], []>} : vector<8x128xf32>, vector<128x512xf32>, vector<8x512xf32> -> vector<8x512xf32>
    %53 = arith.addf %51, %52 : vector<8x512xf32>
    %54 = vector.extract_strided_slice %53 {offsets = [0, 0], sizes = [8, 128], strides = [1, 1]} : vector<8x512xf32> to vector<8x128xf32>
    %55 = arith.negf %54 : vector<8x128xf32>
    %56 = math.exp %55 : vector<8x128xf32>
    %cst_28 = arith.constant 1.000000e+00 : f32
    %57 = vector.broadcast %cst_28 : f32 to vector<8x128xf32>
    %58 = arith.addf %57, %56 : vector<8x128xf32>
    %59 = arith.divf %57, %58 : vector<8x128xf32>
    %60 = vector.extract_strided_slice %53 {offsets = [0, 128], sizes = [8, 128], strides = [1, 1]} : vector<8x512xf32> to vector<8x128xf32>
    %61 = arith.negf %60 : vector<8x128xf32>
    %62 = math.exp %61 : vector<8x128xf32>
    %cst_29 = arith.constant 1.000000e+00 : f32
    %63 = vector.broadcast %cst_29 : f32 to vector<8x128xf32>
    %64 = arith.addf %63, %62 : vector<8x128xf32>
    %65 = arith.divf %63, %64 : vector<8x128xf32>
    %66 = vector.extract_strided_slice %53 {offsets = [0, 256], sizes = [8, 128], strides = [1, 1]} : vector<8x512xf32> to vector<8x128xf32>
    %67 = math.tanh %66 : vector<8x128xf32>
    %68 = vector.extract_strided_slice %53 {offsets = [0, 384], sizes = [8, 128], strides = [1, 1]} : vector<8x512xf32> to vector<8x128xf32>
    %69 = arith.negf %68 : vector<8x128xf32>
    %70 = math.exp %69 : vector<8x128xf32>
    %cst_30 = arith.constant 1.000000e+00 : f32
    %71 = vector.broadcast %cst_30 : f32 to vector<8x128xf32>
    %72 = arith.addf %71, %70 : vector<8x128xf32>
    %73 = arith.divf %71, %72 : vector<8x128xf32>
    %74 = arith.mulf %65, %42 : vector<8x128xf32>
    %75 = arith.mulf %59, %67 : vector<8x128xf32>
    %76 = arith.addf %74, %75 : vector<8x128xf32>
    %77 = math.tanh %76 : vector<8x128xf32>
    %78 = arith.mulf %73, %77 : vector<8x128xf32>
    %79 = arith.index_cast %c1_i32 : i32 to index
    %c0_31 = arith.constant 0 : index
    %c0_32 = arith.constant 0 : index
    %80 = vector.load %arg6[%79, %c0_31, %c0_32] : memref<8x8x128xf32, #tpu.memory_space<vmem>>, vector<1x8x128xf32>
    %81 = vector.shape_cast %80 : vector<1x8x128xf32> to vector<8x128xf32>
    %82 = vector.shape_cast %78 : vector<8x128xf32> to vector<1x8x128xf32>
    tpu.vector_store %arg6[%79, %c0_31, %c0_32], %82 {strides = array<i32>} : memref<8x8x128xf32, #tpu.memory_space<vmem>>, vector<1x8x128xf32>,
    %c2_i32 = arith.constant 2 : i32
    %83 = arith.index_cast %c2_i32 : i32 to index
    %c0_33 = arith.constant 0 : index
    %c0_34 = arith.constant 0 : index
    %84 = vector.load %arg9[%83, %c0_33, %c0_34] : memref<8x8x512xf32, #tpu.memory_space<vmem>>, vector<1x8x512xf32>
    %85 = vector.shape_cast %84 : vector<1x8x512xf32> to vector<8x512xf32>
    %cst_35 = arith.constant dense<0.000000e+00> : vector<8x512xf32>
    %86 = tpu.matmul %78, %12, %cst_35 {dimension_numbers = #tpu.dot_dimension_numbers<[1], [0], [0], [1], [0, 0, 1, 1], [], []>} : vector<8x128xf32>, vector<128x512xf32>, vector<8x512xf32> -> vector<8x512xf32>
    %87 = arith.addf %85, %86 : vector<8x512xf32>
    %88 = vector.extract_strided_slice %87 {offsets = [0, 0], sizes = [8, 128], strides = [1, 1]} : vector<8x512xf32> to vector<8x128xf32>
    %89 = arith.negf %88 : vector<8x128xf32>
    %90 = math.exp %89 : vector<8x128xf32>
    %cst_36 = arith.constant 1.000000e+00 : f32
    %91 = vector.broadcast %cst_36 : f32 to vector<8x128xf32>
    %92 = arith.addf %91, %90 : vector<8x128xf32>
    %93 = arith.divf %91, %92 : vector<8x128xf32>
    %94 = vector.extract_strided_slice %87 {offsets = [0, 128], sizes = [8, 128], strides = [1, 1]} : vector<8x512xf32> to vector<8x128xf32>
    %95 = arith.negf %94 : vector<8x128xf32>
    %96 = math.exp %95 : vector<8x128xf32>
    %cst_37 = arith.constant 1.000000e+00 : f32
    %97 = vector.broadcast %cst_37 : f32 to vector<8x128xf32>
    %98 = arith.addf %97, %96 : vector<8x128xf32>
    %99 = arith.divf %97, %98 : vector<8x128xf32>
    %100 = vector.extract_strided_slice %87 {offsets = [0, 256], sizes = [8, 128], strides = [1, 1]} : vector<8x512xf32> to vector<8x128xf32>
    %101 = math.tanh %100 : vector<8x128xf32>
    %102 = vector.extract_strided_slice %87 {offsets = [0, 384], sizes = [8, 128], strides = [1, 1]} : vector<8x512xf32> to vector<8x128xf32>
    %103 = arith.negf %102 : vector<8x128xf32>
    %104 = math.exp %103 : vector<8x128xf32>
    %cst_38 = arith.constant 1.000000e+00 : f32
    %105 = vector.broadcast %cst_38 : f32 to vector<8x128xf32>
    %106 = arith.addf %105, %104 : vector<8x128xf32>
    %107 = arith.divf %105, %106 : vector<8x128xf32>
    %108 = arith.mulf %99, %76 : vector<8x128xf32>
    %109 = arith.mulf %93, %101 : vector<8x128xf32>
    %110 = arith.addf %108, %109 : vector<8x128xf32>
    %111 = math.tanh %110 : vector<8x128xf32>
    %112 = arith.mulf %107, %111 : vector<8x128xf32>
    %113 = arith.index_cast %c2_i32 : i32 to index
    %c0_39 = arith.constant 0 : index
    %c0_40 = arith.constant 0 : index
    %114 = vector.load %arg6[%113, %c0_39, %c0_40] : memref<8x8x128xf32, #tpu.memory_space<vmem>>, vector<1x8x128xf32>
    %115 = vector.shape_cast %114 : vector<1x8x128xf32> to vector<8x128xf32>
    %116 = vector.shape_cast %112 : vector<8x128xf32> to vector<1x8x128xf32>
    tpu.vector_store %arg6[%113, %c0_39, %c0_40], %116 {strides = array<i32>} : memref<8x8x128xf32, #tpu.memory_space<vmem>>, vector<1x8x128xf32>,
    %c3_i32 = arith.constant 3 : i32
    %117 = arith.index_cast %c3_i32 : i32 to index
    %c0_41 = arith.constant 0 : index
    %c0_42 = arith.constant 0 : index
    %118 = vector.load %arg9[%117, %c0_41, %c0_42] : memref<8x8x512xf32, #tpu.memory_space<vmem>>, vector<1x8x512xf32>
    %119 = vector.shape_cast %118 : vector<1x8x512xf32> to vector<8x512xf32>
    %cst_43 = arith.constant dense<0.000000e+00> : vector<8x512xf32>
    %120 = tpu.matmul %112, %12, %cst_43 {dimension_numbers = #tpu.dot_dimension_numbers<[1], [0], [0], [1], [0, 0, 1, 1], [], []>} : vector<8x128xf32>, vector<128x512xf32>, vector<8x512xf32> -> vector<8x512xf32>
    %121 = arith.addf %119, %120 : vector<8x512xf32>
    %122 = vector.extract_strided_slice %121 {offsets = [0, 0], sizes = [8, 128], strides = [1, 1]} : vector<8x512xf32> to vector<8x128xf32>
    %123 = arith.negf %122 : vector<8x128xf32>
    %124 = math.exp %123 : vector<8x128xf32>
    %cst_44 = arith.constant 1.000000e+00 : f32
    %125 = vector.broadcast %cst_44 : f32 to vector<8x128xf32>
    %126 = arith.addf %125, %124 : vector<8x128xf32>
    %127 = arith.divf %125, %126 : vector<8x128xf32>
    %128 = vector.extract_strided_slice %121 {offsets = [0, 128], sizes = [8, 128], strides = [1, 1]} : vector<8x512xf32> to vector<8x128xf32>
    %129 = arith.negf %128 : vector<8x128xf32>
    %130 = math.exp %129 : vector<8x128xf32>
    %cst_45 = arith.constant 1.000000e+00 : f32
    %131 = vector.broadcast %cst_45 : f32 to vector<8x128xf32>
    %132 = arith.addf %131, %130 : vector<8x128xf32>
    %133 = arith.divf %131, %132 : vector<8x128xf32>
    %134 = vector.extract_strided_slice %121 {offsets = [0, 256], sizes = [8, 128], strides = [1, 1]} : vector<8x512xf32> to vector<8x128xf32>
    %135 = math.tanh %134 : vector<8x128xf32>
    %136 = vector.extract_strided_slice %121 {offsets = [0, 384], sizes = [8, 128], strides = [1, 1]} : vector<8x512xf32> to vector<8x128xf32>
    %137 = arith.negf %136 : vector<8x128xf32>
    %138 = math.exp %137 : vector<8x128xf32>
    %cst_46 = arith.constant 1.000000e+00 : f32
    %139 = vector.broadcast %cst_46 : f32 to vector<8x128xf32>
    %140 = arith.addf %139, %138 : vector<8x128xf32>
    %141 = arith.divf %139, %140 : vector<8x128xf32>
    %142 = arith.mulf %133, %110 : vector<8x128xf32>
    %143 = arith.mulf %127, %135 : vector<8x128xf32>
    %144 = arith.addf %142, %143 : vector<8x128xf32>
    %145 = math.tanh %144 : vector<8x128xf32>
    %146 = arith.mulf %141, %145 : vector<8x128xf32>
    %147 = arith.index_cast %c3_i32 : i32 to index
    %c0_47 = arith.constant 0 : index
    %c0_48 = arith.constant 0 : index
    %148 = vector.load %arg6[%147, %c0_47, %c0_48] : memref<8x8x128xf32, #tpu.memory_space<vmem>>, vector<1x8x128xf32>
    %149 = vector.shape_cast %148 : vector<1x8x128xf32> to vector<8x128xf32>
    %150 = vector.shape_cast %146 : vector<8x128xf32> to vector<1x8x128xf32>
    tpu.vector_store %arg6[%147, %c0_47, %c0_48], %150 {strides = array<i32>} : memref<8x8x128xf32, #tpu.memory_space<vmem>>, vector<1x8x128xf32>,
    %c4_i32 = arith.constant 4 : i32
    %151 = arith.index_cast %c4_i32 : i32 to index
    %c0_49 = arith.constant 0 : index
    %c0_50 = arith.constant 0 : index
    %152 = vector.load %arg9[%151, %c0_49, %c0_50] : memref<8x8x512xf32, #tpu.memory_space<vmem>>, vector<1x8x512xf32>
    %153 = vector.shape_cast %152 : vector<1x8x512xf32> to vector<8x512xf32>
    %cst_51 = arith.constant dense<0.000000e+00> : vector<8x512xf32>
    %154 = tpu.matmul %146, %12, %cst_51 {dimension_numbers = #tpu.dot_dimension_numbers<[1], [0], [0], [1], [0, 0, 1, 1], [], []>} : vector<8x128xf32>, vector<128x512xf32>, vector<8x512xf32> -> vector<8x512xf32>
    %155 = arith.addf %153, %154 : vector<8x512xf32>
    %156 = vector.extract_strided_slice %155 {offsets = [0, 0], sizes = [8, 128], strides = [1, 1]} : vector<8x512xf32> to vector<8x128xf32>
    %157 = arith.negf %156 : vector<8x128xf32>
    %158 = math.exp %157 : vector<8x128xf32>
    %cst_52 = arith.constant 1.000000e+00 : f32
    %159 = vector.broadcast %cst_52 : f32 to vector<8x128xf32>
    %160 = arith.addf %159, %158 : vector<8x128xf32>
    %161 = arith.divf %159, %160 : vector<8x128xf32>
    %162 = vector.extract_strided_slice %155 {offsets = [0, 128], sizes = [8, 128], strides = [1, 1]} : vector<8x512xf32> to vector<8x128xf32>
    %163 = arith.negf %162 : vector<8x128xf32>
    %164 = math.exp %163 : vector<8x128xf32>
    %cst_53 = arith.constant 1.000000e+00 : f32
    %165 = vector.broadcast %cst_53 : f32 to vector<8x128xf32>
    %166 = arith.addf %165, %164 : vector<8x128xf32>
    %167 = arith.divf %165, %166 : vector<8x128xf32>
    %168 = vector.extract_strided_slice %155 {offsets = [0, 256], sizes = [8, 128], strides = [1, 1]} : vector<8x512xf32> to vector<8x128xf32>
    %169 = math.tanh %168 : vector<8x128xf32>
    %170 = vector.extract_strided_slice %155 {offsets = [0, 384], sizes = [8, 128], strides = [1, 1]} : vector<8x512xf32> to vector<8x128xf32>
    %171 = arith.negf %170 : vector<8x128xf32>
    %172 = math.exp %171 : vector<8x128xf32>
    %cst_54 = arith.constant 1.000000e+00 : f32
    %173 = vector.broadcast %cst_54 : f32 to vector<8x128xf32>
    %174 = arith.addf %173, %172 : vector<8x128xf32>
    %175 = arith.divf %173, %174 : vector<8x128xf32>
    %176 = arith.mulf %167, %144 : vector<8x128xf32>
    %177 = arith.mulf %161, %169 : vector<8x128xf32>
    %178 = arith.addf %176, %177 : vector<8x128xf32>
    %179 = math.tanh %178 : vector<8x128xf32>
    %180 = arith.mulf %175, %179 : vector<8x128xf32>
    %181 = arith.index_cast %c4_i32 : i32 to index
    %c0_55 = arith.constant 0 : index
    %c0_56 = arith.constant 0 : index
    %182 = vector.load %arg6[%181, %c0_55, %c0_56] : memref<8x8x128xf32, #tpu.memory_space<vmem>>, vector<1x8x128xf32>
    %183 = vector.shape_cast %182 : vector<1x8x128xf32> to vector<8x128xf32>
    %184 = vector.shape_cast %180 : vector<8x128xf32> to vector<1x8x128xf32>
    tpu.vector_store %arg6[%181, %c0_55, %c0_56], %184 {strides = array<i32>} : memref<8x8x128xf32, #tpu.memory_space<vmem>>, vector<1x8x128xf32>,
    %c5_i32 = arith.constant 5 : i32
    %185 = arith.index_cast %c5_i32 : i32 to index
    %c0_57 = arith.constant 0 : index
    %c0_58 = arith.constant 0 : index
    %186 = vector.load %arg9[%185, %c0_57, %c0_58] : memref<8x8x512xf32, #tpu.memory_space<vmem>>, vector<1x8x512xf32>
    %187 = vector.shape_cast %186 : vector<1x8x512xf32> to vector<8x512xf32>
    %cst_59 = arith.constant dense<0.000000e+00> : vector<8x512xf32>
    %188 = tpu.matmul %180, %12, %cst_59 {dimension_numbers = #tpu.dot_dimension_numbers<[1], [0], [0], [1], [0, 0, 1, 1], [], []>} : vector<8x128xf32>, vector<128x512xf32>, vector<8x512xf32> -> vector<8x512xf32>
    %189 = arith.addf %187, %188 : vector<8x512xf32>
    %190 = vector.extract_strided_slice %189 {offsets = [0, 0], sizes = [8, 128], strides = [1, 1]} : vector<8x512xf32> to vector<8x128xf32>
    %191 = arith.negf %190 : vector<8x128xf32>
    %192 = math.exp %191 : vector<8x128xf32>
    %cst_60 = arith.constant 1.000000e+00 : f32
    %193 = vector.broadcast %cst_60 : f32 to vector<8x128xf32>
    %194 = arith.addf %193, %192 : vector<8x128xf32>
    %195 = arith.divf %193, %194 : vector<8x128xf32>
    %196 = vector.extract_strided_slice %189 {offsets = [0, 128], sizes = [8, 128], strides = [1, 1]} : vector<8x512xf32> to vector<8x128xf32>
    %197 = arith.negf %196 : vector<8x128xf32>
    %198 = math.exp %197 : vector<8x128xf32>
    %cst_61 = arith.constant 1.000000e+00 : f32
    %199 = vector.broadcast %cst_61 : f32 to vector<8x128xf32>
    %200 = arith.addf %199, %198 : vector<8x128xf32>
    %201 = arith.divf %199, %200 : vector<8x128xf32>
    %202 = vector.extract_strided_slice %189 {offsets = [0, 256], sizes = [8, 128], strides = [1, 1]} : vector<8x512xf32> to vector<8x128xf32>
    %203 = math.tanh %202 : vector<8x128xf32>
    %204 = vector.extract_strided_slice %189 {offsets = [0, 384], sizes = [8, 128], strides = [1, 1]} : vector<8x512xf32> to vector<8x128xf32>
    %205 = arith.negf %204 : vector<8x128xf32>
    %206 = math.exp %205 : vector<8x128xf32>
    %cst_62 = arith.constant 1.000000e+00 : f32
    %207 = vector.broadcast %cst_62 : f32 to vector<8x128xf32>
    %208 = arith.addf %207, %206 : vector<8x128xf32>
    %209 = arith.divf %207, %208 : vector<8x128xf32>
    %210 = arith.mulf %201, %178 : vector<8x128xf32>
    %211 = arith.mulf %195, %203 : vector<8x128xf32>
    %212 = arith.addf %210, %211 : vector<8x128xf32>
    %213 = math.tanh %212 : vector<8x128xf32>
    %214 = arith.mulf %209, %213 : vector<8x128xf32>
    %215 = arith.index_cast %c5_i32 : i32 to index
    %c0_63 = arith.constant 0 : index
    %c0_64 = arith.constant 0 : index
    %216 = vector.load %arg6[%215, %c0_63, %c0_64] : memref<8x8x128xf32, #tpu.memory_space<vmem>>, vector<1x8x128xf32>
    %217 = vector.shape_cast %216 : vector<1x8x128xf32> to vector<8x128xf32>
    %218 = vector.shape_cast %214 : vector<8x128xf32> to vector<1x8x128xf32>
    tpu.vector_store %arg6[%215, %c0_63, %c0_64], %218 {strides = array<i32>} : memref<8x8x128xf32, #tpu.memory_space<vmem>>, vector<1x8x128xf32>,
    %c6_i32 = arith.constant 6 : i32
    %219 = arith.index_cast %c6_i32 : i32 to index
    %c0_65 = arith.constant 0 : index
    %c0_66 = arith.constant 0 : index
    %220 = vector.load %arg9[%219, %c0_65, %c0_66] : memref<8x8x512xf32, #tpu.memory_space<vmem>>, vector<1x8x512xf32>
    %221 = vector.shape_cast %220 : vector<1x8x512xf32> to vector<8x512xf32>
    %cst_67 = arith.constant dense<0.000000e+00> : vector<8x512xf32>
    %222 = tpu.matmul %214, %12, %cst_67 {dimension_numbers = #tpu.dot_dimension_numbers<[1], [0], [0], [1], [0, 0, 1, 1], [], []>} : vector<8x128xf32>, vector<128x512xf32>, vector<8x512xf32> -> vector<8x512xf32>
    %223 = arith.addf %221, %222 : vector<8x512xf32>
    %224 = vector.extract_strided_slice %223 {offsets = [0, 0], sizes = [8, 128], strides = [1, 1]} : vector<8x512xf32> to vector<8x128xf32>
    %225 = arith.negf %224 : vector<8x128xf32>
    %226 = math.exp %225 : vector<8x128xf32>
    %cst_68 = arith.constant 1.000000e+00 : f32
    %227 = vector.broadcast %cst_68 : f32 to vector<8x128xf32>
    %228 = arith.addf %227, %226 : vector<8x128xf32>
    %229 = arith.divf %227, %228 : vector<8x128xf32>
    %230 = vector.extract_strided_slice %223 {offsets = [0, 128], sizes = [8, 128], strides = [1, 1]} : vector<8x512xf32> to vector<8x128xf32>
    %231 = arith.negf %230 : vector<8x128xf32>
    %232 = math.exp %231 : vector<8x128xf32>
    %cst_69 = arith.constant 1.000000e+00 : f32
    %233 = vector.broadcast %cst_69 : f32 to vector<8x128xf32>
    %234 = arith.addf %233, %232 : vector<8x128xf32>
    %235 = arith.divf %233, %234 : vector<8x128xf32>
    %236 = vector.extract_strided_slice %223 {offsets = [0, 256], sizes = [8, 128], strides = [1, 1]} : vector<8x512xf32> to vector<8x128xf32>
    %237 = math.tanh %236 : vector<8x128xf32>
    %238 = vector.extract_strided_slice %223 {offsets = [0, 384], sizes = [8, 128], strides = [1, 1]} : vector<8x512xf32> to vector<8x128xf32>
    %239 = arith.negf %238 : vector<8x128xf32>
    %240 = math.exp %239 : vector<8x128xf32>
    %cst_70 = arith.constant 1.000000e+00 : f32
    %241 = vector.broadcast %cst_70 : f32 to vector<8x128xf32>
    %242 = arith.addf %241, %240 : vector<8x128xf32>
    %243 = arith.divf %241, %242 : vector<8x128xf32>
    %244 = arith.mulf %235, %212 : vector<8x128xf32>
    %245 = arith.mulf %229, %237 : vector<8x128xf32>
    %246 = arith.addf %244, %245 : vector<8x128xf32>
    %247 = math.tanh %246 : vector<8x128xf32>
    %248 = arith.mulf %243, %247 : vector<8x128xf32>
    %249 = arith.index_cast %c6_i32 : i32 to index
    %c0_71 = arith.constant 0 : index
    %c0_72 = arith.constant 0 : index
    %250 = vector.load %arg6[%249, %c0_71, %c0_72] : memref<8x8x128xf32, #tpu.memory_space<vmem>>, vector<1x8x128xf32>
    %251 = vector.shape_cast %250 : vector<1x8x128xf32> to vector<8x128xf32>
    %252 = vector.shape_cast %248 : vector<8x128xf32> to vector<1x8x128xf32>
    tpu.vector_store %arg6[%249, %c0_71, %c0_72], %252 {strides = array<i32>} : memref<8x8x128xf32, #tpu.memory_space<vmem>>, vector<1x8x128xf32>,
    %c7_i32 = arith.constant 7 : i32
    %253 = arith.index_cast %c7_i32 : i32 to index
    %c0_73 = arith.constant 0 : index
    %c0_74 = arith.constant 0 : index
    %254 = vector.load %arg9[%253, %c0_73, %c0_74] : memref<8x8x512xf32, #tpu.memory_space<vmem>>, vector<1x8x512xf32>
    %255 = vector.shape_cast %254 : vector<1x8x512xf32> to vector<8x512xf32>
    %cst_75 = arith.constant dense<0.000000e+00> : vector<8x512xf32>
    %256 = tpu.matmul %248, %12, %cst_75 {dimension_numbers = #tpu.dot_dimension_numbers<[1], [0], [0], [1], [0, 0, 1, 1], [], []>} : vector<8x128xf32>, vector<128x512xf32>, vector<8x512xf32> -> vector<8x512xf32>
    %257 = arith.addf %255, %256 : vector<8x512xf32>
    %258 = vector.extract_strided_slice %257 {offsets = [0, 0], sizes = [8, 128], strides = [1, 1]} : vector<8x512xf32> to vector<8x128xf32>
    %259 = arith.negf %258 : vector<8x128xf32>
    %260 = math.exp %259 : vector<8x128xf32>
    %cst_76 = arith.constant 1.000000e+00 : f32
    %261 = vector.broadcast %cst_76 : f32 to vector<8x128xf32>
    %262 = arith.addf %261, %260 : vector<8x128xf32>
    %263 = arith.divf %261, %262 : vector<8x128xf32>
    %264 = vector.extract_strided_slice %257 {offsets = [0, 128], sizes = [8, 128], strides = [1, 1]} : vector<8x512xf32> to vector<8x128xf32>
    %265 = arith.negf %264 : vector<8x128xf32>
    %266 = math.exp %265 : vector<8x128xf32>
    %cst_77 = arith.constant 1.000000e+00 : f32
    %267 = vector.broadcast %cst_77 : f32 to vector<8x128xf32>
    %268 = arith.addf %267, %266 : vector<8x128xf32>
    %269 = arith.divf %267, %268 : vector<8x128xf32>
    %270 = vector.extract_strided_slice %257 {offsets = [0, 256], sizes = [8, 128], strides = [1, 1]} : vector<8x512xf32> to vector<8x128xf32>
    %271 = math.tanh %270 : vector<8x128xf32>
    %272 = vector.extract_strided_slice %257 {offsets = [0, 384], sizes = [8, 128], strides = [1, 1]} : vector<8x512xf32> to vector<8x128xf32>
    %273 = arith.negf %272 : vector<8x128xf32>
    %274 = math.exp %273 : vector<8x128xf32>
    %cst_78 = arith.constant 1.000000e+00 : f32
    %275 = vector.broadcast %cst_78 : f32 to vector<8x128xf32>
    %276 = arith.addf %275, %274 : vector<8x128xf32>
    %277 = arith.divf %275, %276 : vector<8x128xf32>
    %278 = arith.mulf %269, %246 : vector<8x128xf32>
    %279 = arith.mulf %263, %271 : vector<8x128xf32>
    %280 = arith.addf %278, %279 : vector<8x128xf32>
    %281 = math.tanh %280 : vector<8x128xf32>
    %282 = arith.mulf %277, %281 : vector<8x128xf32>
    %283 = arith.index_cast %c7_i32 : i32 to index
    %c0_79 = arith.constant 0 : index
    %c0_80 = arith.constant 0 : index
    %284 = vector.load %arg6[%283, %c0_79, %c0_80] : memref<8x8x128xf32, #tpu.memory_space<vmem>>, vector<1x8x128xf32>
    %285 = vector.shape_cast %284 : vector<1x8x128xf32> to vector<8x128xf32>
    %286 = vector.shape_cast %282 : vector<8x128xf32> to vector<1x8x128xf32>
    tpu.vector_store %arg6[%283, %c0_79, %c0_80], %286 {strides = array<i32>} : memref<8x8x128xf32, #tpu.memory_space<vmem>>, vector<1x8x128xf32>,
    %c8_i32 = arith.constant 8 : i32
    %c0_81 = arith.constant 0 : index
    %c0_82 = arith.constant 0 : index
    %287 = vector.load %arg7[%c0_81, %c0_82] : memref<8x128xf32, #tpu.memory_space<vmem>>, vector<8x128xf32>
    tpu.vector_store %arg7[%c0_81, %c0_82], %282 {strides = array<i32>} : memref<8x128xf32, #tpu.memory_space<vmem>>, vector<8x128xf32>,
    %c0_83 = arith.constant 0 : index
    %c0_84 = arith.constant 0 : index
    %288 = vector.load %arg8[%c0_83, %c0_84] : memref<8x128xf32, #tpu.memory_space<vmem>>, vector<8x128xf32>
    tpu.vector_store %arg8[%c0_83, %c0_84], %280 {strides = array<i32>} : memref<8x128xf32, #tpu.memory_space<vmem>>, vector<8x128xf32>,
    return
  }
  func.func @transform_0(%arg0: i32, %arg1: i32) -> (i32, i32, i32) {
    %c0_i32 = arith.constant 0 : i32
    %c0_i32_0 = arith.constant 0 : i32
    return %arg1, %arg0, %c0_i32 : i32, i32, i32
  }
  func.func @transform_1(%arg0: i32, %arg1: i32) -> (i32, i32) {
    %c0_i32 = arith.constant 0 : i32
    %c0_i32_0 = arith.constant 0 : i32
    %c0_i32_1 = arith.constant 0 : i32
    return %c0_i32, %c0_i32_0 : i32, i32
  }
  func.func @transform_2(%arg0: i32, %arg1: i32) -> (i32, i32) {
    %c0_i32 = arith.constant 0 : i32
    %c0_i32_0 = arith.constant 0 : i32
    %c0_i32_1 = arith.constant 0 : i32
    return %c0_i32, %c0_i32_0 : i32, i32
  }
  func.func @transform_3(%arg0: i32, %arg1: i32) -> (i32, i32) {
    %c0_i32 = arith.constant 0 : i32
    %c0_i32_0 = arith.constant 0 : i32
    %c0_i32_1 = arith.constant 0 : i32
    return %c0_i32, %c0_i32_0 : i32, i32
  }
  func.func @transform_4(%arg0: i32, %arg1: i32) -> (i32, i32, i32) {
    %c0_i32 = arith.constant 0 : i32
    %c0_i32_0 = arith.constant 0 : i32
    return %arg1, %arg0, %c0_i32 : i32, i32, i32
  }
  func.func @transform_5(%arg0: i32, %arg1: i32) -> (i32, i32) {
    %c0_i32 = arith.constant 0 : i32
    %c0_i32_0 = arith.constant 0 : i32
    return %arg0, %c0_i32 : i32, i32
  }
  func.func @transform_6(%arg0: i32, %arg1: i32) -> (i32, i32) {
    %c0_i32 = arith.constant 0 : i32
    %c0_i32_0 = arith.constant 0 : i32
    return %arg0, %c0_i32 : i32, i32
  }
}

</mosaic_0001>

<llo_original>
// kernel: encoder_forward.2
$region0: #{encoder_forward.2}
  #allocation0 [shape = 'u32[]', space=smem, size = 0x4, offset = 0x4, fixed_abs, tag = 'smem constant byte address 0x4 - core index']
  #allocation1 [shape = 'u32[72,128]{1,0:T(1,128)}', space=vmem, size = 0x9000, scoped, tag = 'internal scratch']
  #allocation2 [shape = 'f32[8,8,512]{2,1,0:T(8,128)}', space=vmem, size = 0x20000, scoped, tag = 'scratch operand']
  %s0 = inlined_call_operand.vmem [shape: f32[8,8,128], index: 0, kind: input, shape index: {}]
  %s1 = inlined_call_operand.hbm [shape: f32[128,512], index: 1, kind: input, shape index: {}]
  %s2 = inlined_call_operand.hbm [shape: f32[128,512], index: 2, kind: input, shape index: {}]
  %s3 = inlined_call_operand.vmem [shape: f32[1,512], index: 3, kind: input, shape index: {}]
  %s4 = inlined_call_operand.vmem [shape: f32[8,8,128], index: 4, kind: output, shape index: {0}]
  %s5 = inlined_call_operand.vmem [shape: f32[8,128], index: 5, kind: output, shape index: {1}]
  %s6 = inlined_call_operand.vmem [shape: f32[8,128], index: 6, kind: output, shape index: {2}]
  %7 = xla_tuple %s4, %s5, %s6
  %s8 = sld [smem:[#allocation0]]
  $region54: #{encoder_forward.2} parent=0
    _
  %s10 = ssub.s32 1, %s8
  %s11 = scalar_select 0, %s10, %s8
  $region1: #{encoder_forward.2} parent=0
    #allocation3 [shape = 'u8[262144]{0}', space=vmem, size = 0x40000, scoped, tag = 'input window, operand 1, single buffered']
    #allocation4 [shape = 's32[1]{0}', space=sflag, size = 0x4, scoped, tag = 'scoped memory for encoder_forward.2']
    #allocation5 [shape = 'u8[262144]{0}', space=vmem, size = 0x40000, scoped, tag = 'input window, operand 2, single buffered']
    #allocation6 [shape = 's32[1]{0}', space=sflag, size = 0x4, scoped, tag = 'scoped memory for encoder_forward.2']
    %12 = vsyncpa [#allocation4], 0
    %13 = vsyncpa [#allocation6], 0
    // Predicated region
    $region2: #{encoder_forward.2} parent=1 // pred_check
      _
    $region3: #{encoder_forward.2} parent=1 // pred_check_branch
      %15 = sbr.rel (0) target = $region5
    $region4: #{encoder_forward.2} parent=1 // pred_region
      _
    $region5: #{encoder_forward.2} parent=1 // pred_fallthru
      _
    // Predicated region
    $region6: #{encoder_forward.2} parent=1 // pred_check
      _
    $region7: #{encoder_forward.2} parent=1 // pred_check_branch
      %17 = sbr.rel (0) target = $region9
    $region8: #{encoder_forward.2} parent=1 // pred_region
      %19 = vsyncadd [#allocation4], 0
      %s20 = sshll.u32 %s1, 4
      %s21 = int_to_ptr.hbm [resolvable:$true] %s20
      %s22 = sshll.u32 [#allocation3], 4
      %s23 = int_to_ptr.vmem [resolvable:$true] %s22
      %28 = dma.hbm_to_vmem [thread:$0]  %s21, 8192, %s23, [#allocation4], 512, 512, 32
    $region9: #{encoder_forward.2} parent=1 // pred_fallthru
      _
    // Predicated region
    $region10: #{encoder_forward.2} parent=1 // pred_check
      _
    $region11: #{encoder_forward.2} parent=1 // pred_check_branch
      %30 = sbr.rel (0) target = $region13
    $region12: #{encoder_forward.2} parent=1 // pred_region
      %32 = vsyncadd [#allocation6], 0
      %s33 = sshll.u32 %s2, 4
      %s34 = int_to_ptr.hbm [resolvable:$true] %s33
      %s35 = sshll.u32 [#allocation5], 4
      %s36 = int_to_ptr.vmem [resolvable:$true] %s35
      %41 = dma.hbm_to_vmem [thread:$0]  %s34, 8192, %s36, [#allocation6], 512, 512, 32
    $region13: #{encoder_forward.2} parent=1 // pred_fallthru
      _
    // Predicated region
    $region14: #{encoder_forward.2} parent=1 // pred_check
      _
    $region15: #{encoder_forward.2} parent=1 // pred_check_branch
      %43 = sbr.rel (0) target = $region17
    $region16: #{encoder_forward.2} parent=1 // pred_region
      _
    $region17: #{encoder_forward.2} parent=1 // pred_fallthru
      _
    // Predicated region
    $region18: #{encoder_forward.2} parent=1 // pred_check
      _
    $region19: #{encoder_forward.2} parent=1 // pred_check_branch
      %45 = sbr.rel (0) target = $region21
    $region20: #{encoder_forward.2} parent=1 // pred_region
      %47 = dma.done [#allocation4], 8192
    $region21: #{encoder_forward.2} parent=1 // pred_fallthru
      _
    // Predicated region
    $region22: #{encoder_forward.2} parent=1 // pred_check
      _
    $region23: #{encoder_forward.2} parent=1 // pred_check_branch
      %49 = sbr.rel (0) target = $region25
    $region24: #{encoder_forward.2} parent=1 // pred_region
      %51 = dma.done [#allocation6], 8192
    $region25: #{encoder_forward.2} parent=1 // pred_fallthru
      _
    %p52 = scmp.eq.s32.totalorder 0, 0
    // Predicated region
    $region26: #{encoder_forward.2} parent=1 // pred_check
      %p53 = pneg %p52
    $region27: #{encoder_forward.2} parent=1 // pred_check_branch
      %55 = sbr.rel (%p53) target = $region29
    $region28: #{encoder_forward.2} parent=1 // pred_region
      %56 = vst [vmem:[%s5] sm:$0xff] 0.0
      %57 = vst [vmem:[%s6] sm:$0xff] 0.0
    $region29: #{encoder_forward.2} parent=1 // pred_fallthru
      _
    %v58 = vld [vmem:[#allocation3] sm:$0xff]
    %v59 = vld [vmem:[#allocation3 + $0x8] sm:$0xff]
    %v60 = vld [vmem:[#allocation3 + $0x10] sm:$0xff]
    %v61 = vld [vmem:[#allocation3 + $0x18] sm:$0xff]
    %v62 = vld [vmem:[#allocation3 + $0x20] sm:$0xff]
    %v63 = vld [vmem:[#allocation3 + $0x28] sm:$0xff]
    %v64 = vld [vmem:[#allocation3 + $0x30] sm:$0xff]
    %v65 = vld [vmem:[#allocation3 + $0x38] sm:$0xff]
    %v66 = vld [vmem:[#allocation3 + $0x40] sm:$0xff]
    %v67 = vld [vmem:[#allocation3 + $0x48] sm:$0xff]
    %v68 = vld [vmem:[#allocation3 + $0x50] sm:$0xff]
    %v69 = vld [vmem:[#allocation3 + $0x58] sm:$0xff]
    %v70 = vld [vmem:[#allocation3 + $0x60] sm:$0xff]
    %v71 = vld [vmem:[#allocation3 + $0x68] sm:$0xff]
    %v72 = vld [vmem:[#allocation3 + $0x70] sm:$0xff]
    %v73 = vld [vmem:[#allocation3 + $0x78] sm:$0xff]
    %v74 = vld [vmem:[#allocation3 + $0x80] sm:$0xff]
    %v75 = vld [vmem:[#allocation3 + $0x88] sm:$0xff]
    %v76 = vld [vmem:[#allocation3 + $0x90] sm:$0xff]
    %v77 = vld [vmem:[#allocation3 + $0x98] sm:$0xff]
    %v78 = vld [vmem:[#allocation3 + $0xa0] sm:$0xff]
    %v79 = vld [vmem:[#allocation3 + $0xa8] sm:$0xff]
    %v80 = vld [vmem:[#allocation3 + $0xb0] sm:$0xff]
    %v81 = vld [vmem:[#allocation3 + $0xb8] sm:$0xff]
    %v82 = vld [vmem:[#allocation3 + $0xc0] sm:$0xff]
    %v83 = vld [vmem:[#allocation3 + $0xc8] sm:$0xff]
    %v84 = vld [vmem:[#allocation3 + $0xd0] sm:$0xff]
    %v85 = vld [vmem:[#allocation3 + $0xd8] sm:$0xff]
    %v86 = vld [vmem:[#allocation3 + $0xe0] sm:$0xff]
    %v87 = vld [vmem:[#allocation3 + $0xe8] sm:$0xff]
    %v88 = vld [vmem:[#allocation3 + $0xf0] sm:$0xff]
    %v89 = vld [vmem:[#allocation3 + $0xf8] sm:$0xff]
    %v90 = vld [vmem:[#allocation3 + $0x100] sm:$0xff]
    %v91 = vld [vmem:[#allocation3 + $0x108] sm:$0xff]
    %v92 = vld [vmem:[#allocation3 + $0x110] sm:$0xff]
    %v93 = vld [vmem:[#allocation3 + $0x118] sm:$0xff]
    %v94 = vld [vmem:[#allocation3 + $0x120] sm:$0xff]
    %v95 = vld [vmem:[#allocation3 + $0x128] sm:$0xff]
    %v96 = vld [vmem:[#allocation3 + $0x130] sm:$0xff]
    %v97 = vld [vmem:[#allocation3 + $0x138] sm:$0xff]
    %v98 = vld [vmem:[#allocation3 + $0x140] sm:$0xff]
    %v99 = vld [vmem:[#allocation3 + $0x148] sm:$0xff]
    %v100 = vld [vmem:[#allocation3 + $0x150] sm:$0xff]
    %v101 = vld [vmem:[#allocation3 + $0x158] sm:$0xff]
    %v102 = vld [vmem:[#allocation3 + $0x160] sm:$0xff]
    %v103 = vld [vmem:[#allocation3 + $0x168] sm:$0xff]
    %v104 = vld [vmem:[#allocation3 + $0x170] sm:$0xff]
    %v105 = vld [vmem:[#allocation3 + $0x178] sm:$0xff]
    %v106 = vld [vmem:[#allocation3 + $0x180] sm:$0xff]
    %v107 = vld [vmem:[#allocation3 + $0x188] sm:$0xff]
    %v108 = vld [vmem:[#allocation3 + $0x190] sm:$0xff]
    %v109 = vld [vmem:[#allocation3 + $0x198] sm:$0xff]
    %v110 = vld [vmem:[#allocation3 + $0x1a0] sm:$0xff]
    %v111 = vld [vmem:[#allocation3 + $0x1a8] sm:$0xff]
    %v112 = vld [vmem:[#allocation3 + $0x1b0] sm:$0xff]
    %v113 = vld [vmem:[#allocation3 + $0x1b8] sm:$0xff]
    %v114 = vld [vmem:[#allocation3 + $0x1c0] sm:$0xff]
    %v115 = vld [vmem:[#allocation3 + $0x1c8] sm:$0xff]
    %v116 = vld [vmem:[#allocation3 + $0x1d0] sm:$0xff]
    %v117 = vld [vmem:[#allocation3 + $0x1d8] sm:$0xff]
    %v118 = vld [vmem:[#allocation3 + $0x1e0] sm:$0xff]
    %v119 = vld [vmem:[#allocation3 + $0x1e8] sm:$0xff]
    %v120 = vld [vmem:[#allocation3 + $0x1f0] sm:$0xff]
    %v121 = vld [vmem:[#allocation3 + $0x1f8] sm:$0xff]
    %v122 = vld [vmem:[%s0] sm:$0xff]
    %v123 = vld [vmem:[%s0 + $0x8] sm:$0xff]
    %v124 = vld [vmem:[%s0 + $0x10] sm:$0xff]
    %v125 = vld [vmem:[%s0 + $0x18] sm:$0xff]
    %v126 = vld [vmem:[%s0 + $0x20] sm:$0xff]
    %v127 = vld [vmem:[%s0 + $0x28] sm:$0xff]
    %v128 = vld [vmem:[%s0 + $0x30] sm:$0xff]
    %v129 = vld [vmem:[%s0 + $0x38] sm:$0xff]
    %v130 = vld [vmem:[%s3] sm:$0xf]
    %v132 = vperm.slane %v130, 0
    %v133 = vperm.slane %v130, 1
    %v134 = vperm.slane %v130, 2
    %v135 = vperm.slane %v130, 3
    %140 = vmatpush.msra.mxu0 %v118
    %141 = vmatpush.msra.mxu0 %v114
    %142 = vmatpush.msra.mxu0 %v110
    %143 = vmatpush.msra.mxu0 %v106
    %144 = vmatpush.msra.mxu0 %v102
    %145 = vmatpush.msra.mxu0 %v98
    %146 = vmatpush.msra.mxu0 %v94
    %147 = vmatpush.msra.mxu0 %v90
    %148 = vmatpush.msra.mxu0 %v86
    %149 = vmatpush.msra.mxu0 %v82
    %150 = vmatpush.msra.mxu0 %v78
    %151 = vmatpush.msra.mxu0 %v74
    %152 = vmatpush.msra.mxu0 %v70
    %153 = vmatpush.msra.mxu0 %v66
    %154 = vmatpush.msra.mxu0 %v62
    %155 = vmatpush.msra.mxu0 %v58
    %156 = vmatmul.f32.gmra.mxu0 %v122
    %v157 = vpop.f32.mrf.mxu0
    %v158 = vadd.f32 %v132, %v157
    %159 = vmatmul.f32.gmra.mxu0 %v123
    %v160 = vpop.f32.mrf.mxu0
    %v161 = vadd.f32 %v132, %v160
    %162 = vmatmul.f32.gmra.mxu0 %v124
    %v163 = vpop.f32.mrf.mxu0
    %v164 = vadd.f32 %v132, %v163
    %165 = vmatmul.f32.gmra.mxu0 %v125
    %v166 = vpop.f32.mrf.mxu0
    %v167 = vadd.f32 %v132, %v166
    %168 = vmatmul.f32.gmra.mxu0 %v126
    %v169 = vpop.f32.mrf.mxu0
    %v170 = vadd.f32 %v132, %v169
    %171 = vmatmul.f32.gmra.mxu0 %v127
    %v172 = vpop.f32.mrf.mxu0
    %v173 = vadd.f32 %v132, %v172
    %174 = vmatmul.f32.gmra.mxu0 %v128
    %v175 = vpop.f32.mrf.mxu0
    %v176 = vadd.f32 %v132, %v175
    %177 = vmatmul.f32.gmra.mxu0 %v129
    %v178 = vpop.f32.mrf.mxu0
    %v179 = vadd.f32 %v132, %v178
    %180 = vdwg.mxu0
    %181 = vmatpush.msra.mxu0 %v119
    %182 = vmatpush.msra.mxu0 %v115
    %183 = vmatpush.msra.mxu0 %v111
    %184 = vmatpush.msra.mxu0 %v107
    %185 = vmatpush.msra.mxu0 %v103
    %186 = vmatpush.msra.mxu0 %v99
    %187 = vmatpush.msra.mxu0 %v95
    %188 = vmatpush.msra.mxu0 %v91
    %189 = vmatpush.msra.mxu0 %v87
    %190 = vmatpush.msra.mxu0 %v83
    %191 = vmatpush.msra.mxu0 %v79
    %192 = vmatpush.msra.mxu0 %v75
    %193 = vmatpush.msra.mxu0 %v71
    %194 = vmatpush.msra.mxu0 %v67
    %195 = vmatpush.msra.mxu0 %v63
    %196 = vmatpush.msra.mxu0 %v59
    %197 = vmatmul.f32.gmra.mxu0 %v122
    %v198 = vpop.f32.mrf.mxu0
    %v199 = vadd.f32 %v133, %v198
    %200 = vmatmul.f32.gmra.mxu0 %v123
    %v201 = vpop.f32.mrf.mxu0
    %v202 = vadd.f32 %v133, %v201
    %203 = vmatmul.f32.gmra.mxu0 %v124
    %v204 = vpop.f32.mrf.mxu0
    %v205 = vadd.f32 %v133, %v204
    %206 = vmatmul.f32.gmra.mxu0 %v125
    %v207 = vpop.f32.mrf.mxu0
    %v208 = vadd.f32 %v133, %v207
    %209 = vmatmul.f32.gmra.mxu0 %v126
    %v210 = vpop.f32.mrf.mxu0
    %v211 = vadd.f32 %v133, %v210
    %212 = vmatmul.f32.gmra.mxu0 %v127
    %v213 = vpop.f32.mrf.mxu0
    %v214 = vadd.f32 %v133, %v213
    %215 = vmatmul.f32.gmra.mxu0 %v128
    %v216 = vpop.f32.mrf.mxu0
    %v217 = vadd.f32 %v133, %v216
    %218 = vmatmul.f32.gmra.mxu0 %v129
    %v219 = vpop.f32.mrf.mxu0
    %v220 = vadd.f32 %v133, %v219
    %221 = vdwg.mxu0
    %222 = vmatpush.msra.mxu0 %v120
    %223 = vmatpush.msra.mxu0 %v116
    %224 = vmatpush.msra.mxu0 %v112
    %225 = vmatpush.msra.mxu0 %v108
    %226 = vmatpush.msra.mxu0 %v104
    %227 = vmatpush.msra.mxu0 %v100
    %228 = vmatpush.msra.mxu0 %v96
    %229 = vmatpush.msra.mxu0 %v92
    %230 = vmatpush.msra.mxu0 %v88
    %231 = vmatpush.msra.mxu0 %v84
    %232 = vmatpush.msra.mxu0 %v80
    %233 = vmatpush.msra.mxu0 %v76
    %234 = vmatpush.msra.mxu0 %v72
    %235 = vmatpush.msra.mxu0 %v68
    %236 = vmatpush.msra.mxu0 %v64
    %237 = vmatpush.msra.mxu0 %v60
    %238 = vmatmul.f32.gmra.mxu0 %v122
    %v239 = vpop.f32.mrf.mxu0
    %v240 = vadd.f32 %v134, %v239
    %241 = vmatmul.f32.gmra.mxu0 %v123
    %v242 = vpop.f32.mrf.mxu0
    %v243 = vadd.f32 %v134, %v242
    %244 = vmatmul.f32.gmra.mxu0 %v124
    %v245 = vpop.f32.mrf.mxu0
    %v246 = vadd.f32 %v134, %v245
    %247 = vmatmul.f32.gmra.mxu0 %v125
    %v248 = vpop.f32.mrf.mxu0
    %v249 = vadd.f32 %v134, %v248
    %250 = vmatmul.f32.gmra.mxu0 %v126
    %v251 = vpop.f32.mrf.mxu0
    %v252 = vadd.f32 %v134, %v251
    %253 = vmatmul.f32.gmra.mxu0 %v127
    %v254 = vpop.f32.mrf.mxu0
    %v255 = vadd.f32 %v134, %v254
    %256 = vmatmul.f32.gmra.mxu0 %v128
    %v257 = vpop.f32.mrf.mxu0
    %v258 = vadd.f32 %v134, %v257
    %259 = vmatmul.f32.gmra.mxu0 %v129
    %v260 = vpop.f32.mrf.mxu0
    %v261 = vadd.f32 %v134, %v260
    %262 = vdwg.mxu0
    %263 = vmatpush.msra.mxu0 %v121
    %264 = vmatpush.msra.mxu0 %v117
    %265 = vmatpush.msra.mxu0 %v113
    %266 = vmatpush.msra.mxu0 %v109
    %267 = vmatpush.msra.mxu0 %v105
    %268 = vmatpush.msra.mxu0 %v101
    %269 = vmatpush.msra.mxu0 %v97
    %270 = vmatpush.msra.mxu0 %v93
    %271 = vmatpush.msra.mxu0 %v89
    %272 = vmatpush.msra.mxu0 %v85
    %273 = vmatpush.msra.mxu0 %v81
    %274 = vmatpush.msra.mxu0 %v77
    %275 = vmatpush.msra.mxu0 %v73
    %276 = vmatpush.msra.mxu0 %v69
    %277 = vmatpush.msra.mxu0 %v65
    %278 = vmatpush.msra.mxu0 %v61
    %279 = vmatmul.f32.gmra.mxu0 %v122
    %v280 = vpop.f32.mrf.mxu0
    %v281 = vadd.f32 %v135, %v280
    %282 = vmatmul.f32.gmra.mxu0 %v123
    %v283 = vpop.f32.mrf.mxu0
    %v284 = vadd.f32 %v135, %v283
    %285 = vmatmul.f32.gmra.mxu0 %v124
    %v286 = vpop.f32.mrf.mxu0
    %v287 = vadd.f32 %v135, %v286
    %288 = vmatmul.f32.gmra.mxu0 %v125
    %v289 = vpop.f32.mrf.mxu0
    %v290 = vadd.f32 %v135, %v289
    %291 = vmatmul.f32.gmra.mxu0 %v126
    %v292 = vpop.f32.mrf.mxu0
    %v293 = vadd.f32 %v135, %v292
    %294 = vmatmul.f32.gmra.mxu0 %v127
    %v295 = vpop.f32.mrf.mxu0
    %v296 = vadd.f32 %v135, %v295
    %297 = vmatmul.f32.gmra.mxu0 %v128
    %v298 = vpop.f32.mrf.mxu0
    %v299 = vadd.f32 %v135, %v298
    %300 = vmatmul.f32.gmra.mxu0 %v129
    %v301 = vpop.f32.mrf.mxu0
    %v302 = vadd.f32 %v135, %v301
    %303 = vdwg.mxu0
    %304 = vst [vmem:[#allocation2] sm:$0xff] %v158
    %305 = vst [vmem:[#allocation2 + $0x8] sm:$0xff] %v199
    %306 = vst [vmem:[#allocation2 + $0x10] sm:$0xff] %v240
    %307 = vst [vmem:[#allocation2 + $0x18] sm:$0xff] %v281
    %308 = vst [vmem:[#allocation2 + $0x20] sm:$0xff] %v161
    %309 = vst [vmem:[#allocation2 + $0x28] sm:$0xff] %v202
    %310 = vst [vmem:[#allocation2 + $0x30] sm:$0xff] %v243
    %311 = vst [vmem:[#allocation2 + $0x38] sm:$0xff] %v284
    %312 = vst [vmem:[#allocation2 + $0x40] sm:$0xff] %v164
    %313 = vst [vmem:[#allocation2 + $0x48] sm:$0xff] %v205
    %314 = vst [vmem:[#allocation2 + $0x50] sm:$0xff] %v246
    %315 = vst [vmem:[#allocation2 + $0x58] sm:$0xff] %v287
    %316 = vst [vmem:[#allocation2 + $0x60] sm:$0xff] %v167
    %317 = vst [vmem:[#allocation2 + $0x68] sm:$0xff] %v208
    %318 = vst [vmem:[#allocation2 + $0x70] sm:$0xff] %v249
    %319 = vst [vmem:[#allocation2 + $0x78] sm:$0xff] %v290
    %320 = vst [vmem:[#allocation2 + $0x80] sm:$0xff] %v170
    %321 = vst [vmem:[#allocation2 + $0x88] sm:$0xff] %v211
    %322 = vst [vmem:[#allocation2 + $0x90] sm:$0xff] %v252
    %323 = vst [vmem:[#allocation2 + $0x98] sm:$0xff] %v293
    %324 = vst [vmem:[#allocation2 + $0xa0] sm:$0xff] %v173
    %325 = vst [vmem:[#allocation2 + $0xa8] sm:$0xff] %v214
    %326 = vst [vmem:[#allocation2 + $0xb0] sm:$0xff] %v255
    %327 = vst [vmem:[#allocation2 + $0xb8] sm:$0xff] %v296
    %328 = vst [vmem:[#allocation2 + $0xc0] sm:$0xff] %v176
    %329 = vst [vmem:[#allocation2 + $0xc8] sm:$0xff] %v217
    %330 = vst [vmem:[#allocation2 + $0xd0] sm:$0xff] %v258
    %331 = vst [vmem:[#allocation2 + $0xd8] sm:$0xff] %v299
    %332 = vst [vmem:[#allocation2 + $0xe0] sm:$0xff] %v179
    %333 = vst [vmem:[#allocation2 + $0xe8] sm:$0xff] %v220
    %334 = vst [vmem:[#allocation2 + $0xf0] sm:$0xff] %v261
    %335 = vst [vmem:[#allocation2 + $0xf8] sm:$0xff] %v302
    %v336 = vld [vmem:[#allocation5] sm:$0xff]
    %v337 = vld [vmem:[#allocation5 + $0x8] sm:$0xff]
    %v338 = vld [vmem:[#allocation5 + $0x10] sm:$0xff]
    %v339 = vld [vmem:[#allocation5 + $0x18] sm:$0xff]
    %v340 = vld [vmem:[#allocation5 + $0x20] sm:$0xff]
    %v341 = vld [vmem:[#allocation5 + $0x28] sm:$0xff]
    %v342 = vld [vmem:[#allocation5 + $0x30] sm:$0xff]
    %v343 = vld [vmem:[#allocation5 + $0x38] sm:$0xff]
    %v344 = vld [vmem:[#allocation5 + $0x40] sm:$0xff]
    %v345 = vld [vmem:[#allocation5 + $0x48] sm:$0xff]
    %v346 = vld [vmem:[#allocation5 + $0x50] sm:$0xff]
    %v347 = vld [vmem:[#allocation5 + $0x58] sm:$0xff]
    %v348 = vld [vmem:[#allocation5 + $0x60] sm:$0xff]
    %v349 = vld [vmem:[#allocation5 + $0x68] sm:$0xff]
    %v350 = vld [vmem:[#allocation5 + $0x70] sm:$0xff]
    %v351 = vld [vmem:[#allocation5 + $0x78] sm:$0xff]
    %v352 = vld [vmem:[#allocation5 + $0x80] sm:$0xff]
    %v353 = vld [vmem:[#allocation5 + $0x88] sm:$0xff]
    %v354 = vld [vmem:[#allocation5 + $0x90] sm:$0xff]
    %v355 = vld [vmem:[#allocation5 + $0x98] sm:$0xff]
    %v356 = vld [vmem:[#allocation5 + $0xa0] sm:$0xff]
    %v357 = vld [vmem:[#allocation5 + $0xa8] sm:$0xff]
    %v358 = vld [vmem:[#allocation5 + $0xb0] sm:$0xff]
    %v359 = vld [vmem:[#allocation5 + $0xb8] sm:$0xff]
    %v360 = vld [vmem:[#allocation5 + $0xc0] sm:$0xff]
    %v361 = vld [vmem:[#allocation5 + $0xc8] sm:$0xff]
    %v362 = vld [vmem:[#allocation5 + $0xd0] sm:$0xff]
    %v363 = vld [vmem:[#allocation5 + $0xd8] sm:$0xff]
    %v364 = vld [vmem:[#allocation5 + $0xe0] sm:$0xff]
    %v365 = vld [vmem:[#allocation5 + $0xe8] sm:$0xff]
    %v366 = vld [vmem:[#allocation5 + $0xf0] sm:$0xff]
    %v367 = vld [vmem:[#allocation5 + $0xf8] sm:$0xff]
    %v368 = vld [vmem:[#allocation5 + $0x100] sm:$0xff]
    %v369 = vld [vmem:[#allocation5 + $0x108] sm:$0xff]
    %v370 = vld [vmem:[#allocation5 + $0x110] sm:$0xff]
    %v371 = vld [vmem:[#allocation5 + $0x118] sm:$0xff]
    %v372 = vld [vmem:[#allocation5 + $0x120] sm:$0xff]
    %v373 = vld [vmem:[#allocation5 + $0x128] sm:$0xff]
    %v374 = vld [vmem:[#allocation5 + $0x130] sm:$0xff]
    %v375 = vld [vmem:[#allocation5 + $0x138] sm:$0xff]
    %v376 = vld [vmem:[#allocation5 + $0x140] sm:$0xff]
    %v377 = vld [vmem:[#allocation5 + $0x148] sm:$0xff]
    %v378 = vld [vmem:[#allocation5 + $0x150] sm:$0xff]
    %v379 = vld [vmem:[#allocation5 + $0x158] sm:$0xff]
    %v380 = vld [vmem:[#allocation5 + $0x160] sm:$0xff]
    %v381 = vld [vmem:[#allocation5 + $0x168] sm:$0xff]
    %v382 = vld [vmem:[#allocation5 + $0x170] sm:$0xff]
    %v383 = vld [vmem:[#allocation5 + $0x178] sm:$0xff]
    %v384 = vld [vmem:[#allocation5 + $0x180] sm:$0xff]
    %v385 = vld [vmem:[#allocation5 + $0x188] sm:$0xff]
    %v386 = vld [vmem:[#allocation5 + $0x190] sm:$0xff]
    %v387 = vld [vmem:[#allocation5 + $0x198] sm:$0xff]
    %v388 = vld [vmem:[#allocation5 + $0x1a0] sm:$0xff]
    %v389 = vld [vmem:[#allocation5 + $0x1a8] sm:$0xff]
    %v390 = vld [vmem:[#allocation5 + $0x1b0] sm:$0xff]
    %v391 = vld [vmem:[#allocation5 + $0x1b8] sm:$0xff]
    %v392 = vld [vmem:[#allocation5 + $0x1c0] sm:$0xff]
    %v393 = vld [vmem:[#allocation5 + $0x1c8] sm:$0xff]
    %v394 = vld [vmem:[#allocation5 + $0x1d0] sm:$0xff]
    %v395 = vld [vmem:[#allocation5 + $0x1d8] sm:$0xff]
    %v396 = vld [vmem:[#allocation5 + $0x1e0] sm:$0xff]
    %v397 = vld [vmem:[#allocation5 + $0x1e8] sm:$0xff]
    %v398 = vld [vmem:[#allocation5 + $0x1f0] sm:$0xff]
    %v399 = vld [vmem:[#allocation5 + $0x1f8] sm:$0xff]
    %v400 = vld [vmem:[%s5] sm:$0xff]
    %v401 = vld [vmem:[%s6] sm:$0xff]
    %v402 = vld [vmem:[#allocation2] sm:$0xff]
    %v403 = vld [vmem:[#allocation2 + $0x8] sm:$0xff]
    %v404 = vld [vmem:[#allocation2 + $0x10] sm:$0xff]
    %v405 = vld [vmem:[#allocation2 + $0x18] sm:$0xff]
    %406 = vmatpush.msra.mxu0 %v396
    %407 = vmatpush.msra.mxu0 %v392
    %408 = vmatpush.msra.mxu0 %v388
    %409 = vmatpush.msra.mxu0 %v384
    %410 = vmatpush.msra.mxu0 %v380
    %411 = vmatpush.msra.mxu0 %v376
    %412 = vmatpush.msra.mxu0 %v372
    %413 = vmatpush.msra.mxu0 %v368
    %414 = vmatpush.msra.mxu0 %v364
    %415 = vmatpush.msra.mxu0 %v360
    %416 = vmatpush.msra.mxu0 %v356
    %417 = vmatpush.msra.mxu0 %v352
    %418 = vmatpush.msra.mxu0 %v348
    %419 = vmatpush.msra.mxu0 %v344
    %420 = vmatpush.msra.mxu0 %v340
    %421 = vmatpush.msra.mxu0 %v336
    %422 = vmatmul.f32.gmra.mxu0 %v400
    %v423 = vpop.f32.mrf.mxu0
    %v424 = vadd.f32 0.0, %v423
    %425 = vdwg.mxu0
    %426 = vmatpush.msra.mxu0 %v397
    %427 = vmatpush.msra.mxu0 %v393
    %428 = vmatpush.msra.mxu0 %v389
    %429 = vmatpush.msra.mxu0 %v385
    %430 = vmatpush.msra.mxu0 %v381
    %431 = vmatpush.msra.mxu0 %v377
    %432 = vmatpush.msra.mxu0 %v373
    %433 = vmatpush.msra.mxu0 %v369
    %434 = vmatpush.msra.mxu0 %v365
    %435 = vmatpush.msra.mxu0 %v361
    %436 = vmatpush.msra.mxu0 %v357
    %437 = vmatpush.msra.mxu0 %v353
    %438 = vmatpush.msra.mxu0 %v349
    %439 = vmatpush.msra.mxu0 %v345
    %440 = vmatpush.msra.mxu0 %v341
    %441 = vmatpush.msra.mxu0 %v337
    %442 = vmatmul.f32.gmra.mxu0 %v400
    %v443 = vpop.f32.mrf.mxu0
    %v444 = vadd.f32 0.0, %v443
    %445 = vdwg.mxu0
    %446 = vmatpush.msra.mxu0 %v398
    %447 = vmatpush.msra.mxu0 %v394
    %448 = vmatpush.msra.mxu0 %v390
    %449 = vmatpush.msra.mxu0 %v386
    %450 = vmatpush.msra.mxu0 %v382
    %451 = vmatpush.msra.mxu0 %v378
    %452 = vmatpush.msra.mxu0 %v374
    %453 = vmatpush.msra.mxu0 %v370
    %454 = vmatpush.msra.mxu0 %v366
    %455 = vmatpush.msra.mxu0 %v362
    %456 = vmatpush.msra.mxu0 %v358
    %457 = vmatpush.msra.mxu0 %v354
    %458 = vmatpush.msra.mxu0 %v350
    %459 = vmatpush.msra.mxu0 %v346
    %460 = vmatpush.msra.mxu0 %v342
    %461 = vmatpush.msra.mxu0 %v338
    %462 = vmatmul.f32.gmra.mxu0 %v400
    %v463 = vpop.f32.mrf.mxu0
    %v464 = vadd.f32 0.0, %v463
    %465 = vdwg.mxu0
    %466 = vmatpush.msra.mxu0 %v399
    %467 = vmatpush.msra.mxu0 %v395
    %468 = vmatpush.msra.mxu0 %v391
    %469 = vmatpush.msra.mxu0 %v387
    %470 = vmatpush.msra.mxu0 %v383
    %471 = vmatpush.msra.mxu0 %v379
    %472 = vmatpush.msra.mxu0 %v375
    %473 = vmatpush.msra.mxu0 %v371
    %474 = vmatpush.msra.mxu0 %v367
    %475 = vmatpush.msra.mxu0 %v363
    %476 = vmatpush.msra.mxu0 %v359
    %477 = vmatpush.msra.mxu0 %v355
    %478 = vmatpush.msra.mxu0 %v351
    %479 = vmatpush.msra.mxu0 %v347
    %480 = vmatpush.msra.mxu0 %v343
    %481 = vmatpush.msra.mxu0 %v339
    %482 = vmatmul.f32.gmra.mxu0 %v400
    %v483 = vpop.f32.mrf.mxu0
    %v484 = vadd.f32 0.0, %v483
    %485 = vdwg.mxu0
    %v486 = vadd.f32 %v402, %v424
    %v487 = vadd.f32 %v403, %v444
    %v488 = vadd.f32 %v404, %v464
    %v489 = vadd.f32 %v405, %v484
    %v490 = vxor.u32 %v486, 2147483648
    %v491 = vmul.f32 %v490, 1.442695
    %v492 = vpow.pop %v491
    %v493 = vadd.f32 %v492, 1.0
    %v494 = vrcp.pop %v493
    %v495 = vmul.f32 %v493, %v494
    %v496 = vsub.f32 1.0, %v495
    %v497 = vmul.f32 %v494, %v496
    %v498 = vadd.f32 %v494, %v497
    %vm499 = vweird.f32 %v493
    %vm500 = vweird.f32 %v494
    %vm501 = vmor %vm499, %vm500
    %v502 = vsel %vm501, %v494, %v498
    %v503 = vand.u32 2147483647, %v493
    %vm504 = vcmp.eq.f32.partialorder %v503, 8.507059e+37
    %v505 = vand.u32 %v493, 2147483648
    %v506 = vor.u32 1.1754944e-38, %v505
    %v507 = vsel %vm504, %v506, %v502
    %v508 = vmul.f32 1.0, %v507
    %v509 = vxor.u32 %v487, 2147483648
    %v510 = vmul.f32 %v509, 1.442695
    %v511 = vpow.pop %v510
    %v512 = vadd.f32 %v511, 1.0
    %v513 = vrcp.pop %v512
    %v514 = vmul.f32 %v512, %v513
    %v515 = vsub.f32 1.0, %v514
    %v516 = vmul.f32 %v513, %v515
    %v517 = vadd.f32 %v513, %v516
    %vm518 = vweird.f32 %v512
    %vm519 = vweird.f32 %v513
    %vm520 = vmor %vm518, %vm519
    %v521 = vsel %vm520, %v513, %v517
    %v522 = vand.u32 2147483647, %v512
    %vm523 = vcmp.eq.f32.partialorder %v522, 8.507059e+37
    %v524 = vand.u32 %v512, 2147483648
    %v525 = vor.u32 1.1754944e-38, %v524
    %v526 = vsel %vm523, %v525, %v521
    %v527 = vmul.f32 1.0, %v526
    %v528 = vtanh.pop %v488
    %v529 = vxor.u32 %v489, 2147483648
    %v530 = vmul.f32 %v529, 1.442695
    %v531 = vpow.pop %v530
    %v532 = vadd.f32 %v531, 1.0
    %v533 = vrcp.pop %v532
    %v534 = vmul.f32 %v532, %v533
    %v535 = vsub.f32 1.0, %v534
    %v536 = vmul.f32 %v533, %v535
    %v537 = vadd.f32 %v533, %v536
    %vm538 = vweird.f32 %v532
    %vm539 = vweird.f32 %v533
    %vm540 = vmor %vm538, %vm539
    %v541 = vsel %vm540, %v533, %v537
    %v542 = vand.u32 2147483647, %v532
    %vm543 = vcmp.eq.f32.partialorder %v542, 8.507059e+37
    %v544 = vand.u32 %v532, 2147483648
    %v545 = vor.u32 1.1754944e-38, %v544
    %v546 = vsel %vm543, %v545, %v541
    %v547 = vmul.f32 1.0, %v546
    %v548 = vmul.f32 %v527, %v401
    %v549 = vmul.f32 %v508, %v528
    %v550 = vadd.f32 %v548, %v549
    %v551 = vtanh.pop %v550
    %v552 = vmul.f32 %v547, %v551
    %553 = vst [vmem:[%s4] sm:$0xff] %v552
    %s554 = scalar_lea.vmem [#allocation2], 32
    %v555 = vld [vmem:[%s554] sm:$0xff]
    %v556 = vld [vmem:[%s554 + $0x8] sm:$0xff]
    %v557 = vld [vmem:[%s554 + $0x10] sm:$0xff]
    %v558 = vld [vmem:[%s554 + $0x18] sm:$0xff]
    %559 = vmatpush.msra.mxu0 %v396
    %560 = vmatpush.msra.mxu0 %v392
    %561 = vmatpush.msra.mxu0 %v388
    %562 = vmatpush.msra.mxu0 %v384
    %563 = vmatpush.msra.mxu0 %v380
    %564 = vmatpush.msra.mxu0 %v376
    %565 = vmatpush.msra.mxu0 %v372
    %566 = vmatpush.msra.mxu0 %v368
    %567 = vmatpush.msra.mxu0 %v364
    %568 = vmatpush.msra.mxu0 %v360
    %569 = vmatpush.msra.mxu0 %v356
    %570 = vmatpush.msra.mxu0 %v352
    %571 = vmatpush.msra.mxu0 %v348
    %572 = vmatpush.msra.mxu0 %v344
    %573 = vmatpush.msra.mxu0 %v340
    %574 = vmatpush.msra.mxu0 %v336
    %575 = vmatmul.f32.gmra.mxu0 %v552
    %v576 = vpop.f32.mrf.mxu0
    %v577 = vadd.f32 0.0, %v576
    %578 = vdwg.mxu0
    %579 = vmatpush.msra.mxu0 %v397
    %580 = vmatpush.msra.mxu0 %v393
    %581 = vmatpush.msra.mxu0 %v389
    %582 = vmatpush.msra.mxu0 %v385
    %583 = vmatpush.msra.mxu0 %v381
    %584 = vmatpush.msra.mxu0 %v377
    %585 = vmatpush.msra.mxu0 %v373
    %586 = vmatpush.msra.mxu0 %v369
    %587 = vmatpush.msra.mxu0 %v365
    %588 = vmatpush.msra.mxu0 %v361
    %589 = vmatpush.msra.mxu0 %v357
    %590 = vmatpush.msra.mxu0 %v353
    %591 = vmatpush.msra.mxu0 %v349
    %592 = vmatpush.msra.mxu0 %v345
    %593 = vmatpush.msra.mxu0 %v341
    %594 = vmatpush.msra.mxu0 %v337
    %595 = vmatmul.f32.gmra.mxu0 %v552
    %v596 = vpop.f32.mrf.mxu0
    %v597 = vadd.f32 0.0, %v596
    %598 = vdwg.mxu0
    %599 = vmatpush.msra.mxu0 %v398
    %600 = vmatpush.msra.mxu0 %v394
    %601 = vmatpush.msra.mxu0 %v390
    %602 = vmatpush.msra.mxu0 %v386
    %603 = vmatpush.msra.mxu0 %v382
    %604 = vmatpush.msra.mxu0 %v378
    %605 = vmatpush.msra.mxu0 %v374
    %606 = vmatpush.msra.mxu0 %v370
    %607 = vmatpush.msra.mxu0 %v366
    %608 = vmatpush.msra.mxu0 %v362
    %609 = vmatpush.msra.mxu0 %v358
    %610 = vmatpush.msra.mxu0 %v354
    %611 = vmatpush.msra.mxu0 %v350
    %612 = vmatpush.msra.mxu0 %v346
    %613 = vmatpush.msra.mxu0 %v342
    %614 = vmatpush.msra.mxu0 %v338
    %615 = vmatmul.f32.gmra.mxu0 %v552
    %v616 = vpop.f32.mrf.mxu0
    %v617 = vadd.f32 0.0, %v616
    %618 = vdwg.mxu0
    %619 = vmatpush.msra.mxu0 %v399
    %620 = vmatpush.msra.mxu0 %v395
    %621 = vmatpush.msra.mxu0 %v391
    %622 = vmatpush.msra.mxu0 %v387
    %623 = vmatpush.msra.mxu0 %v383
    %624 = vmatpush.msra.mxu0 %v379
    %625 = vmatpush.msra.mxu0 %v375
    %626 = vmatpush.msra.mxu0 %v371
    %627 = vmatpush.msra.mxu0 %v367
    %628 = vmatpush.msra.mxu0 %v363
    %629 = vmatpush.msra.mxu0 %v359
    %630 = vmatpush.msra.mxu0 %v355
    %631 = vmatpush.msra.mxu0 %v351
    %632 = vmatpush.msra.mxu0 %v347
    %633 = vmatpush.msra.mxu0 %v343
    %634 = vmatpush.msra.mxu0 %v339
    %635 = vmatmul.f32.gmra.mxu0 %v552
    %v636 = vpop.f32.mrf.mxu0
    %v637 = vadd.f32 0.0, %v636
    %638 = vdwg.mxu0
    %v639 = vadd.f32 %v555, %v577
    %v640 = vadd.f32 %v556, %v597
    %v641 = vadd.f32 %v557, %v617
    %v642 = vadd.f32 %v558, %v637
    %v643 = vxor.u32 %v639, 2147483648
    %v644 = vmul.f32 %v643, 1.442695
    %v645 = vpow.pop %v644
    %v646 = vadd.f32 %v645, 1.0
    %v647 = vrcp.pop %v646
    %v648 = vmul.f32 %v646, %v647
    %v649 = vsub.f32 1.0, %v648
    %v650 = vmul.f32 %v647, %v649
    %v651 = vadd.f32 %v647, %v650
    %vm652 = vweird.f32 %v646
    %vm653 = vweird.f32 %v647
    %vm654 = vmor %vm652, %vm653
    %v655 = vsel %vm654, %v647, %v651
    %v656 = vand.u32 2147483647, %v646
    %vm657 = vcmp.eq.f32.partialorder %v656, 8.507059e+37
    %v658 = vand.u32 %v646, 2147483648
    %v659 = vor.u32 1.1754944e-38, %v658
    %v660 = vsel %vm657, %v659, %v655
    %v661 = vmul.f32 1.0, %v660
    %v662 = vxor.u32 %v640, 2147483648
    %v663 = vmul.f32 %v662, 1.442695
    %v664 = vpow.pop %v663
    %v665 = vadd.f32 %v664, 1.0
    %v666 = vrcp.pop %v665
    %v667 = vmul.f32 %v665, %v666
    %v668 = vsub.f32 1.0, %v667
    %v669 = vmul.f32 %v666, %v668
    %v670 = vadd.f32 %v666, %v669
    %vm671 = vweird.f32 %v665
    %vm672 = vweird.f32 %v666
    %vm673 = vmor %vm671, %vm672
    %v674 = vsel %vm673, %v666, %v670
    %v675 = vand.u32 2147483647, %v665
    %vm676 = vcmp.eq.f32.partialorder %v675, 8.507059e+37
    %v677 = vand.u32 %v665, 2147483648
    %v678 = vor.u32 1.1754944e-38, %v677
    %v679 = vsel %vm676, %v678, %v674
    %v680 = vmul.f32 1.0, %v679
    %v681 = vtanh.pop %v641
    %v682 = vxor.u32 %v642, 2147483648
    %v683 = vmul.f32 %v682, 1.442695
    %v684 = vpow.pop %v683
    %v685 = vadd.f32 %v684, 1.0
    %v686 = vrcp.pop %v685
    %v687 = vmul.f32 %v685, %v686
    %v688 = vsub.f32 1.0, %v687
    %v689 = vmul.f32 %v686, %v688
    %v690 = vadd.f32 %v686, %v689
    %vm691 = vweird.f32 %v685
    %vm692 = vweird.f32 %v686
    %vm693 = vmor %vm691, %vm692
    %v694 = vsel %vm693, %v686, %v690
    %v695 = vand.u32 2147483647, %v685
    %vm696 = vcmp.eq.f32.partialorder %v695, 8.507059e+37
    %v697 = vand.u32 %v685, 2147483648
    %v698 = vor.u32 1.1754944e-38, %v697
    %v699 = vsel %vm696, %v698, %v694
    %v700 = vmul.f32 1.0, %v699
    %v701 = vmul.f32 %v680, %v550
    %v702 = vmul.f32 %v661, %v681
    %v703 = vadd.f32 %v701, %v702
    %v704 = vtanh.pop %v703
    %v705 = vmul.f32 %v700, %v704
    %s706 = scalar_lea.vmem %s4, 8
    %707 = vst [vmem:[%s706] sm:$0xff] %v705
    %s708 = scalar_lea.vmem [#allocation2], 64
    %v709 = vld [vmem:[%s708] sm:$0xff]
    %v710 = vld [vmem:[%s708 + $0x8] sm:$0xff]
    %v711 = vld [vmem:[%s708 + $0x10] sm:$0xff]
    %v712 = vld [vmem:[%s708 + $0x18] sm:$0xff]
    %713 = vmatpush.msra.mxu0 %v396
    %714 = vmatpush.msra.mxu0 %v392
    %715 = vmatpush.msra.mxu0 %v388
    %716 = vmatpush.msra.mxu0 %v384
    %717 = vmatpush.msra.mxu0 %v380
    %718 = vmatpush.msra.mxu0 %v376
    %719 = vmatpush.msra.mxu0 %v372
    %720 = vmatpush.msra.mxu0 %v368
    %721 = vmatpush.msra.mxu0 %v364
    %722 = vmatpush.msra.mxu0 %v360
    %723 = vmatpush.msra.mxu0 %v356
    %724 = vmatpush.msra.mxu0 %v352
    %725 = vmatpush.msra.mxu0 %v348
    %726 = vmatpush.msra.mxu0 %v344
    %727 = vmatpush.msra.mxu0 %v340
    %728 = vmatpush.msra.mxu0 %v336
    %729 = vmatmul.f32.gmra.mxu0 %v705
    %v730 = vpop.f32.mrf.mxu0
    %v731 = vadd.f32 0.0, %v730
    %732 = vdwg.mxu0
    %733 = vmatpush.msra.mxu0 %v397
    %734 = vmatpush.msra.mxu0 %v393
    %735 = vmatpush.msra.mxu0 %v389
    %736 = vmatpush.msra.mxu0 %v385
    %737 = vmatpush.msra.mxu0 %v381
    %738 = vmatpush.msra.mxu0 %v377
    %739 = vmatpush.msra.mxu0 %v373
    %740 = vmatpush.msra.mxu0 %v369
    %741 = vmatpush.msra.mxu0 %v365
    %742 = vmatpush.msra.mxu0 %v361
    %743 = vmatpush.msra.mxu0 %v357
    %744 = vmatpush.msra.mxu0 %v353
    %745 = vmatpush.msra.mxu0 %v349
    %746 = vmatpush.msra.mxu0 %v345
    %747 = vmatpush.msra.mxu0 %v341
    %748 = vmatpush.msra.mxu0 %v337
    %749 = vmatmul.f32.gmra.mxu0 %v705
    %v750 = vpop.f32.mrf.mxu0
    %v751 = vadd.f32 0.0, %v750
    %752 = vdwg.mxu0
    %753 = vmatpush.msra.mxu0 %v398
    %754 = vmatpush.msra.mxu0 %v394
    %755 = vmatpush.msra.mxu0 %v390
    %756 = vmatpush.msra.mxu0 %v386
    %757 = vmatpush.msra.mxu0 %v382
    %758 = vmatpush.msra.mxu0 %v378
    %759 = vmatpush.msra.mxu0 %v374
    %760 = vmatpush.msra.mxu0 %v370
    %761 = vmatpush.msra.mxu0 %v366
    %762 = vmatpush.msra.mxu0 %v362
    %763 = vmatpush.msra.mxu0 %v358
    %764 = vmatpush.msra.mxu0 %v354
    %765 = vmatpush.msra.mxu0 %v350
    %766 = vmatpush.msra.mxu0 %v346
    %767 = vmatpush.msra.mxu0 %v342
    %768 = vmatpush.msra.mxu0 %v338
    %769 = vmatmul.f32.gmra.mxu0 %v705
    %v770 = vpop.f32.mrf.mxu0
    %v771 = vadd.f32 0.0, %v770
    %772 = vdwg.mxu0
    %773 = vmatpush.msra.mxu0 %v399
    %774 = vmatpush.msra.mxu0 %v395
    %775 = vmatpush.msra.mxu0 %v391
    %776 = vmatpush.msra.mxu0 %v387
    %777 = vmatpush.msra.mxu0 %v383
    %778 = vmatpush.msra.mxu0 %v379
    %779 = vmatpush.msra.mxu0 %v375
    %780 = vmatpush.msra.mxu0 %v371
    %781 = vmatpush.msra.mxu0 %v367
    %782 = vmatpush.msra.mxu0 %v363
    %783 = vmatpush.msra.mxu0 %v359
    %784 = vmatpush.msra.mxu0 %v355
    %785 = vmatpush.msra.mxu0 %v351
    %786 = vmatpush.msra.mxu0 %v347
    %787 = vmatpush.msra.mxu0 %v343
    %788 = vmatpush.msra.mxu0 %v339
    %789 = vmatmul.f32.gmra.mxu0 %v705
    %v790 = vpop.f32.mrf.mxu0
    %v791 = vadd.f32 0.0, %v790
    %792 = vdwg.mxu0
    %v793 = vadd.f32 %v709, %v731
    %v794 = vadd.f32 %v710, %v751
    %v795 = vadd.f32 %v711, %v771
    %v796 = vadd.f32 %v712, %v791
    %v797 = vxor.u32 %v793, 2147483648
    %v798 = vmul.f32 %v797, 1.442695
    %v799 = vpow.pop %v798
    %v800 = vadd.f32 %v799, 1.0
    %v801 = vrcp.pop %v800
    %v802 = vmul.f32 %v800, %v801
    %v803 = vsub.f32 1.0, %v802
    %v804 = vmul.f32 %v801, %v803
    %v805 = vadd.f32 %v801, %v804
    %vm806 = vweird.f32 %v800
    %vm807 = vweird.f32 %v801
    %vm808 = vmor %vm806, %vm807
    %v809 = vsel %vm808, %v801, %v805
    %v810 = vand.u32 2147483647, %v800
    %vm811 = vcmp.eq.f32.partialorder %v810, 8.507059e+37
    %v812 = vand.u32 %v800, 2147483648
    %v813 = vor.u32 1.1754944e-38, %v812
    %v814 = vsel %vm811, %v813, %v809
    %v815 = vmul.f32 1.0, %v814
    %v816 = vxor.u32 %v794, 2147483648
    %v817 = vmul.f32 %v816, 1.442695
    %v818 = vpow.pop %v817
    %v819 = vadd.f32 %v818, 1.0
    %v820 = vrcp.pop %v819
    %v821 = vmul.f32 %v819, %v820
    %v822 = vsub.f32 1.0, %v821
    %v823 = vmul.f32 %v820, %v822
    %v824 = vadd.f32 %v820, %v823
    %vm825 = vweird.f32 %v819
    %vm826 = vweird.f32 %v820
    %vm827 = vmor %vm825, %vm826
    %v828 = vsel %vm827, %v820, %v824
    %v829 = vand.u32 2147483647, %v819
    %vm830 = vcmp.eq.f32.partialorder %v829, 8.507059e+37
    %v831 = vand.u32 %v819, 2147483648
    %v832 = vor.u32 1.1754944e-38, %v831
    %v833 = vsel %vm830, %v832, %v828
    %v834 = vmul.f32 1.0, %v833
    %v835 = vtanh.pop %v795
    %v836 = vxor.u32 %v796, 2147483648
    %v837 = vmul.f32 %v836, 1.442695
    %v838 = vpow.pop %v837
    %v839 = vadd.f32 %v838, 1.0
    %v840 = vrcp.pop %v839
    %v841 = vmul.f32 %v839, %v840
    %v842 = vsub.f32 1.0, %v841
    %v843 = vmul.f32 %v840, %v842
    %v844 = vadd.f32 %v840, %v843
    %vm845 = vweird.f32 %v839
    %vm846 = vweird.f32 %v840
    %vm847 = vmor %vm845, %vm846
    %v848 = vsel %vm847, %v840, %v844
    %v849 = vand.u32 2147483647, %v839
    %vm850 = vcmp.eq.f32.partialorder %v849, 8.507059e+37
    %v851 = vand.u32 %v839, 2147483648
    %v852 = vor.u32 1.1754944e-38, %v851
    %v853 = vsel %vm850, %v852, %v848
    %v854 = vmul.f32 1.0, %v853
    %v855 = vmul.f32 %v834, %v703
    %v856 = vmul.f32 %v815, %v835
    %v857 = vadd.f32 %v855, %v856
    %v858 = vtanh.pop %v857
    %v859 = vmul.f32 %v854, %v858
    %s860 = scalar_lea.vmem %s4, 16
    %861 = vst [vmem:[%s860] sm:$0xff] %v859
    %s862 = scalar_lea.vmem [#allocation2], 96
    %v863 = vld [vmem:[%s862] sm:$0xff]
    %v864 = vld [vmem:[%s862 + $0x8] sm:$0xff]
    %v865 = vld [vmem:[%s862 + $0x10] sm:$0xff]
    %v866 = vld [vmem:[%s862 + $0x18] sm:$0xff]
    %867 = vmatpush.msra.mxu0 %v396
    %868 = vmatpush.msra.mxu0 %v392
    %869 = vmatpush.msra.mxu0 %v388
    %870 = vmatpush.msra.mxu0 %v384
    %871 = vmatpush.msra.mxu0 %v380
    %872 = vmatpush.msra.mxu0 %v376
    %873 = vmatpush.msra.mxu0 %v372
    %874 = vmatpush.msra.mxu0 %v368
    %875 = vmatpush.msra.mxu0 %v364
    %876 = vmatpush.msra.mxu0 %v360
    %877 = vmatpush.msra.mxu0 %v356
    %878 = vmatpush.msra.mxu0 %v352
    %879 = vmatpush.msra.mxu0 %v348
    %880 = vmatpush.msra.mxu0 %v344
    %881 = vmatpush.msra.mxu0 %v340
    %882 = vmatpush.msra.mxu0 %v336
    %883 = vmatmul.f32.gmra.mxu0 %v859
    %v884 = vpop.f32.mrf.mxu0
    %v885 = vadd.f32 0.0, %v884
    %886 = vdwg.mxu0
    %887 = vmatpush.msra.mxu0 %v397
    %888 = vmatpush.msra.mxu0 %v393
    %889 = vmatpush.msra.mxu0 %v389
    %890 = vmatpush.msra.mxu0 %v385
    %891 = vmatpush.msra.mxu0 %v381
    %892 = vmatpush.msra.mxu0 %v377
    %893 = vmatpush.msra.mxu0 %v373
    %894 = vmatpush.msra.mxu0 %v369
    %895 = vmatpush.msra.mxu0 %v365
    %896 = vmatpush.msra.mxu0 %v361
    %897 = vmatpush.msra.mxu0 %v357
    %898 = vmatpush.msra.mxu0 %v353
    %899 = vmatpush.msra.mxu0 %v349
    %900 = vmatpush.msra.mxu0 %v345
    %901 = vmatpush.msra.mxu0 %v341
    %902 = vmatpush.msra.mxu0 %v337
    %903 = vmatmul.f32.gmra.mxu0 %v859
    %v904 = vpop.f32.mrf.mxu0
    %v905 = vadd.f32 0.0, %v904
    %906 = vdwg.mxu0
    %907 = vmatpush.msra.mxu0 %v398
    %908 = vmatpush.msra.mxu0 %v394
    %909 = vmatpush.msra.mxu0 %v390
    %910 = vmatpush.msra.mxu0 %v386
    %911 = vmatpush.msra.mxu0 %v382
    %912 = vmatpush.msra.mxu0 %v378
    %913 = vmatpush.msra.mxu0 %v374
    %914 = vmatpush.msra.mxu0 %v370
    %915 = vmatpush.msra.mxu0 %v366
    %916 = vmatpush.msra.mxu0 %v362
    %917 = vmatpush.msra.mxu0 %v358
    %918 = vmatpush.msra.mxu0 %v354
    %919 = vmatpush.msra.mxu0 %v350
    %920 = vmatpush.msra.mxu0 %v346
    %921 = vmatpush.msra.mxu0 %v342
    %922 = vmatpush.msra.mxu0 %v338
    %923 = vmatmul.f32.gmra.mxu0 %v859
    %v924 = vpop.f32.mrf.mxu0
    %v925 = vadd.f32 0.0, %v924
    %926 = vdwg.mxu0
    %927 = vmatpush.msra.mxu0 %v399
    %928 = vmatpush.msra.mxu0 %v395
    %929 = vmatpush.msra.mxu0 %v391
    %930 = vmatpush.msra.mxu0 %v387
    %931 = vmatpush.msra.mxu0 %v383
    %932 = vmatpush.msra.mxu0 %v379
    %933 = vmatpush.msra.mxu0 %v375
    %934 = vmatpush.msra.mxu0 %v371
    %935 = vmatpush.msra.mxu0 %v367
    %936 = vmatpush.msra.mxu0 %v363
    %937 = vmatpush.msra.mxu0 %v359
    %938 = vmatpush.msra.mxu0 %v355
    %939 = vmatpush.msra.mxu0 %v351
    %940 = vmatpush.msra.mxu0 %v347
    %941 = vmatpush.msra.mxu0 %v343
    %942 = vmatpush.msra.mxu0 %v339
    %943 = vmatmul.f32.gmra.mxu0 %v859
    %v944 = vpop.f32.mrf.mxu0
    %v945 = vadd.f32 0.0, %v944
    %946 = vdwg.mxu0
    %v947 = vadd.f32 %v863, %v885
    %v948 = vadd.f32 %v864, %v905
    %v949 = vadd.f32 %v865, %v925
    %v950 = vadd.f32 %v866, %v945
    %v951 = vxor.u32 %v947, 2147483648
    %v952 = vmul.f32 %v951, 1.442695
    %v953 = vpow.pop %v952
    %v954 = vadd.f32 %v953, 1.0
    %v955 = vrcp.pop %v954
    %v956 = vmul.f32 %v954, %v955
    %v957 = vsub.f32 1.0, %v956
    %v958 = vmul.f32 %v955, %v957
    %v959 = vadd.f32 %v955, %v958
    %vm960 = vweird.f32 %v954
    %vm961 = vweird.f32 %v955
    %vm962 = vmor %vm960, %vm961
    %v963 = vsel %vm962, %v955, %v959
    %v964 = vand.u32 2147483647, %v954
    %vm965 = vcmp.eq.f32.partialorder %v964, 8.507059e+37
    %v966 = vand.u32 %v954, 2147483648
    %v967 = vor.u32 1.1754944e-38, %v966
    %v968 = vsel %vm965, %v967, %v963
    %v969 = vmul.f32 1.0, %v968
    %v970 = vxor.u32 %v948, 2147483648
    %v971 = vmul.f32 %v970, 1.442695
    %v972 = vpow.pop %v971
    %v973 = vadd.f32 %v972, 1.0
    %v974 = vrcp.pop %v973
    %v975 = vmul.f32 %v973, %v974
    %v976 = vsub.f32 1.0, %v975
    %v977 = vmul.f32 %v974, %v976
    %v978 = vadd.f32 %v974, %v977
    %vm979 = vweird.f32 %v973
    %vm980 = vweird.f32 %v974
    %vm981 = vmor %vm979, %vm980
    %v982 = vsel %vm981, %v974, %v978
    %v983 = vand.u32 2147483647, %v973
    %vm984 = vcmp.eq.f32.partialorder %v983, 8.507059e+37
    %v985 = vand.u32 %v973, 2147483648
    %v986 = vor.u32 1.1754944e-38, %v985
    %v987 = vsel %vm984, %v986, %v982
    %v988 = vmul.f32 1.0, %v987
    %v989 = vtanh.pop %v949
    %v990 = vxor.u32 %v950, 2147483648
    %v991 = vmul.f32 %v990, 1.442695
    %v992 = vpow.pop %v991
    %v993 = vadd.f32 %v992, 1.0
    %v994 = vrcp.pop %v993
    %v995 = vmul.f32 %v993, %v994
    %v996 = vsub.f32 1.0, %v995
    %v997 = vmul.f32 %v994, %v996
    %v998 = vadd.f32 %v994, %v997
    %vm999 = vweird.f32 %v993
    %vm1000 = vweird.f32 %v994
    %vm1001 = vmor %vm999, %vm1000
    %v1002 = vsel %vm1001, %v994, %v998
    %v1003 = vand.u32 2147483647, %v993
    %vm1004 = vcmp.eq.f32.partialorder %v1003, 8.507059e+37
    %v1005 = vand.u32 %v993, 2147483648
    %v1006 = vor.u32 1.1754944e-38, %v1005
    %v1007 = vsel %vm1004, %v1006, %v1002
    %v1008 = vmul.f32 1.0, %v1007
    %v1009 = vmul.f32 %v988, %v857
    %v1010 = vmul.f32 %v969, %v989
    %v1011 = vadd.f32 %v1009, %v1010
    %v1012 = vtanh.pop %v1011
    %v1013 = vmul.f32 %v1008, %v1012
    %s1014 = scalar_lea.vmem %s4, 24
    %1015 = vst [vmem:[%s1014] sm:$0xff] %v1013
    %s1016 = scalar_lea.vmem [#allocation2], 128
    %v1017 = vld [vmem:[%s1016] sm:$0xff]
    %v1018 = vld [vmem:[%s1016 + $0x8] sm:$0xff]
    %v1019 = vld [vmem:[%s1016 + $0x10] sm:$0xff]
    %v1020 = vld [vmem:[%s1016 + $0x18] sm:$0xff]
    %1021 = vmatpush.msra.mxu0 %v396
    %1022 = vmatpush.msra.mxu0 %v392
    %1023 = vmatpush.msra.mxu0 %v388
    %1024 = vmatpush.msra.mxu0 %v384
    %1025 = vmatpush.msra.mxu0 %v380
    %1026 = vmatpush.msra.mxu0 %v376
    %1027 = vmatpush.msra.mxu0 %v372
    %1028 = vmatpush.msra.mxu0 %v368
    %1029 = vmatpush.msra.mxu0 %v364
    %1030 = vmatpush.msra.mxu0 %v360
    %1031 = vmatpush.msra.mxu0 %v356
    %1032 = vmatpush.msra.mxu0 %v352
    %1033 = vmatpush.msra.mxu0 %v348
    %1034 = vmatpush.msra.mxu0 %v344
    %1035 = vmatpush.msra.mxu0 %v340
    %1036 = vmatpush.msra.mxu0 %v336
    %1037 = vmatmul.f32.gmra.mxu0 %v1013
    %v1038 = vpop.f32.mrf.mxu0
    %v1039 = vadd.f32 0.0, %v1038
    %1040 = vdwg.mxu0
    %1041 = vmatpush.msra.mxu0 %v397
    %1042 = vmatpush.msra.mxu0 %v393
    %1043 = vmatpush.msra.mxu0 %v389
    %1044 = vmatpush.msra.mxu0 %v385
    %1045 = vmatpush.msra.mxu0 %v381
    %1046 = vmatpush.msra.mxu0 %v377
    %1047 = vmatpush.msra.mxu0 %v373
    %1048 = vmatpush.msra.mxu0 %v369
    %1049 = vmatpush.msra.mxu0 %v365
    %1050 = vmatpush.msra.mxu0 %v361
    %1051 = vmatpush.msra.mxu0 %v357
    %1052 = vmatpush.msra.mxu0 %v353
    %1053 = vmatpush.msra.mxu0 %v349
    %1054 = vmatpush.msra.mxu0 %v345
    %1055 = vmatpush.msra.mxu0 %v341
    %1056 = vmatpush.msra.mxu0 %v337
    %1057 = vmatmul.f32.gmra.mxu0 %v1013
    %v1058 = vpop.f32.mrf.mxu0
    %v1059 = vadd.f32 0.0, %v1058
    %1060 = vdwg.mxu0
    %1061 = vmatpush.msra.mxu0 %v398
    %1062 = vmatpush.msra.mxu0 %v394
    %1063 = vmatpush.msra.mxu0 %v390
    %1064 = vmatpush.msra.mxu0 %v386
    %1065 = vmatpush.msra.mxu0 %v382
    %1066 = vmatpush.msra.mxu0 %v378
    %1067 = vmatpush.msra.mxu0 %v374
    %1068 = vmatpush.msra.mxu0 %v370
    %1069 = vmatpush.msra.mxu0 %v366
    %1070 = vmatpush.msra.mxu0 %v362
    %1071 = vmatpush.msra.mxu0 %v358
    %1072 = vmatpush.msra.mxu0 %v354
    %1073 = vmatpush.msra.mxu0 %v350
    %1074 = vmatpush.msra.mxu0 %v346
    %1075 = vmatpush.msra.mxu0 %v342
    %1076 = vmatpush.msra.mxu0 %v338
    %1077 = vmatmul.f32.gmra.mxu0 %v1013
    %v1078 = vpop.f32.mrf.mxu0
    %v1079 = vadd.f32 0.0, %v1078
    %1080 = vdwg.mxu0
    %1081 = vmatpush.msra.mxu0 %v399
    %1082 = vmatpush.msra.mxu0 %v395
    %1083 = vmatpush.msra.mxu0 %v391
    %1084 = vmatpush.msra.mxu0 %v387
    %1085 = vmatpush.msra.mxu0 %v383
    %1086 = vmatpush.msra.mxu0 %v379
    %1087 = vmatpush.msra.mxu0 %v375
    %1088 = vmatpush.msra.mxu0 %v371
    %1089 = vmatpush.msra.mxu0 %v367
    %1090 = vmatpush.msra.mxu0 %v363
    %1091 = vmatpush.msra.mxu0 %v359
    %1092 = vmatpush.msra.mxu0 %v355
    %1093 = vmatpush.msra.mxu0 %v351
    %1094 = vmatpush.msra.mxu0 %v347
    %1095 = vmatpush.msra.mxu0 %v343
    %1096 = vmatpush.msra.mxu0 %v339
    %1097 = vmatmul.f32.gmra.mxu0 %v1013
    %v1098 = vpop.f32.mrf.mxu0
    %v1099 = vadd.f32 0.0, %v1098
    %1100 = vdwg.mxu0
    %v1101 = vadd.f32 %v1017, %v1039
    %v1102 = vadd.f32 %v1018, %v1059
    %v1103 = vadd.f32 %v1019, %v1079
    %v1104 = vadd.f32 %v1020, %v1099
    %v1105 = vxor.u32 %v1101, 2147483648
    %v1106 = vmul.f32 %v1105, 1.442695
    %v1107 = vpow.pop %v1106
    %v1108 = vadd.f32 %v1107, 1.0
    %v1109 = vrcp.pop %v1108
    %v1110 = vmul.f32 %v1108, %v1109
    %v1111 = vsub.f32 1.0, %v1110
    %v1112 = vmul.f32 %v1109, %v1111
    %v1113 = vadd.f32 %v1109, %v1112
    %vm1114 = vweird.f32 %v1108
    %vm1115 = vweird.f32 %v1109
    %vm1116 = vmor %vm1114, %vm1115
    %v1117 = vsel %vm1116, %v1109, %v1113
    %v1118 = vand.u32 2147483647, %v1108
    %vm1119 = vcmp.eq.f32.partialorder %v1118, 8.507059e+37
    %v1120 = vand.u32 %v1108, 2147483648
    %v1121 = vor.u32 1.1754944e-38, %v1120
    %v1122 = vsel %vm1119, %v1121, %v1117
    %v1123 = vmul.f32 1.0, %v1122
    %v1124 = vxor.u32 %v1102, 2147483648
    %v1125 = vmul.f32 %v1124, 1.442695
    %v1126 = vpow.pop %v1125
    %v1127 = vadd.f32 %v1126, 1.0
    %v1128 = vrcp.pop %v1127
    %v1129 = vmul.f32 %v1127, %v1128
    %v1130 = vsub.f32 1.0, %v1129
    %v1131 = vmul.f32 %v1128, %v1130
    %v1132 = vadd.f32 %v1128, %v1131
    %vm1133 = vweird.f32 %v1127
    %vm1134 = vweird.f32 %v1128
    %vm1135 = vmor %vm1133, %vm1134
    %v1136 = vsel %vm1135, %v1128, %v1132
    %v1137 = vand.u32 2147483647, %v1127
    %vm1138 = vcmp.eq.f32.partialorder %v1137, 8.507059e+37
    %v1139 = vand.u32 %v1127, 2147483648
    %v1140 = vor.u32 1.1754944e-38, %v1139
    %v1141 = vsel %vm1138, %v1140, %v1136
    %v1142 = vmul.f32 1.0, %v1141
    %v1143 = vtanh.pop %v1103
    %v1144 = vxor.u32 %v1104, 2147483648
    %v1145 = vmul.f32 %v1144, 1.442695
    %v1146 = vpow.pop %v1145
    %v1147 = vadd.f32 %v1146, 1.0
    %v1148 = vrcp.pop %v1147
    %v1149 = vmul.f32 %v1147, %v1148
    %v1150 = vsub.f32 1.0, %v1149
    %v1151 = vmul.f32 %v1148, %v1150
    %v1152 = vadd.f32 %v1148, %v1151
    %vm1153 = vweird.f32 %v1147
    %vm1154 = vweird.f32 %v1148
    %vm1155 = vmor %vm1153, %vm1154
    %v1156 = vsel %vm1155, %v1148, %v1152
    %v1157 = vand.u32 2147483647, %v1147
    %vm1158 = vcmp.eq.f32.partialorder %v1157, 8.507059e+37
    %v1159 = vand.u32 %v1147, 2147483648
    %v1160 = vor.u32 1.1754944e-38, %v1159
    %v1161 = vsel %vm1158, %v1160, %v1156
    %v1162 = vmul.f32 1.0, %v1161
    %v1163 = vmul.f32 %v1142, %v1011
    %v1164 = vmul.f32 %v1123, %v1143
    %v1165 = vadd.f32 %v1163, %v1164
    %v1166 = vtanh.pop %v1165
    %v1167 = vmul.f32 %v1162, %v1166
    %s1168 = scalar_lea.vmem %s4, 32
    %1169 = vst [vmem:[%s1168] sm:$0xff] %v1167
    %s1170 = scalar_lea.vmem [#allocation2], 160
    %v1171 = vld [vmem:[%s1170] sm:$0xff]
    %v1172 = vld [vmem:[%s1170 + $0x8] sm:$0xff]
    %v1173 = vld [vmem:[%s1170 + $0x10] sm:$0xff]
    %v1174 = vld [vmem:[%s1170 + $0x18] sm:$0xff]
    %1175 = vmatpush.msra.mxu0 %v396
    %1176 = vmatpush.msra.mxu0 %v392
    %1177 = vmatpush.msra.mxu0 %v388
    %1178 = vmatpush.msra.mxu0 %v384
    %1179 = vmatpush.msra.mxu0 %v380
    %1180 = vmatpush.msra.mxu0 %v376
    %1181 = vmatpush.msra.mxu0 %v372
    %1182 = vmatpush.msra.mxu0 %v368
    %1183 = vmatpush.msra.mxu0 %v364
    %1184 = vmatpush.msra.mxu0 %v360
    %1185 = vmatpush.msra.mxu0 %v356
    %1186 = vmatpush.msra.mxu0 %v352
    %1187 = vmatpush.msra.mxu0 %v348
    %1188 = vmatpush.msra.mxu0 %v344
    %1189 = vmatpush.msra.mxu0 %v340
    %1190 = vmatpush.msra.mxu0 %v336
    %1191 = vmatmul.f32.gmra.mxu0 %v1167
    %v1192 = vpop.f32.mrf.mxu0
    %v1193 = vadd.f32 0.0, %v1192
    %1194 = vdwg.mxu0
    %1195 = vmatpush.msra.mxu0 %v397
    %1196 = vmatpush.msra.mxu0 %v393
    %1197 = vmatpush.msra.mxu0 %v389
    %1198 = vmatpush.msra.mxu0 %v385
    %1199 = vmatpush.msra.mxu0 %v381
    %1200 = vmatpush.msra.mxu0 %v377
    %1201 = vmatpush.msra.mxu0 %v373
    %1202 = vmatpush.msra.mxu0 %v369
    %1203 = vmatpush.msra.mxu0 %v365
    %1204 = vmatpush.msra.mxu0 %v361
    %1205 = vmatpush.msra.mxu0 %v357
    %1206 = vmatpush.msra.mxu0 %v353
    %1207 = vmatpush.msra.mxu0 %v349
    %1208 = vmatpush.msra.mxu0 %v345
    %1209 = vmatpush.msra.mxu0 %v341
    %1210 = vmatpush.msra.mxu0 %v337
    %1211 = vmatmul.f32.gmra.mxu0 %v1167
    %v1212 = vpop.f32.mrf.mxu0
    %v1213 = vadd.f32 0.0, %v1212
    %1214 = vdwg.mxu0
    %1215 = vmatpush.msra.mxu0 %v398
    %1216 = vmatpush.msra.mxu0 %v394
    %1217 = vmatpush.msra.mxu0 %v390
    %1218 = vmatpush.msra.mxu0 %v386
    %1219 = vmatpush.msra.mxu0 %v382
    %1220 = vmatpush.msra.mxu0 %v378
    %1221 = vmatpush.msra.mxu0 %v374
    %1222 = vmatpush.msra.mxu0 %v370
    %1223 = vmatpush.msra.mxu0 %v366
    %1224 = vmatpush.msra.mxu0 %v362
    %1225 = vmatpush.msra.mxu0 %v358
    %1226 = vmatpush.msra.mxu0 %v354
    %1227 = vmatpush.msra.mxu0 %v350
    %1228 = vmatpush.msra.mxu0 %v346
    %1229 = vmatpush.msra.mxu0 %v342
    %1230 = vmatpush.msra.mxu0 %v338
    %1231 = vmatmul.f32.gmra.mxu0 %v1167
    %v1232 = vpop.f32.mrf.mxu0
    %v1233 = vadd.f32 0.0, %v1232
    %1234 = vdwg.mxu0
    %1235 = vmatpush.msra.mxu0 %v399
    %1236 = vmatpush.msra.mxu0 %v395
    %1237 = vmatpush.msra.mxu0 %v391
    %1238 = vmatpush.msra.mxu0 %v387
    %1239 = vmatpush.msra.mxu0 %v383
    %1240 = vmatpush.msra.mxu0 %v379
    %1241 = vmatpush.msra.mxu0 %v375
    %1242 = vmatpush.msra.mxu0 %v371
    %1243 = vmatpush.msra.mxu0 %v367
    %1244 = vmatpush.msra.mxu0 %v363
    %1245 = vmatpush.msra.mxu0 %v359
    %1246 = vmatpush.msra.mxu0 %v355
    %1247 = vmatpush.msra.mxu0 %v351
    %1248 = vmatpush.msra.mxu0 %v347
    %1249 = vmatpush.msra.mxu0 %v343
    %1250 = vmatpush.msra.mxu0 %v339
    %1251 = vmatmul.f32.gmra.mxu0 %v1167
    %v1252 = vpop.f32.mrf.mxu0
    %v1253 = vadd.f32 0.0, %v1252
    %1254 = vdwg.mxu0
    %v1255 = vadd.f32 %v1171, %v1193
    %v1256 = vadd.f32 %v1172, %v1213
    %v1257 = vadd.f32 %v1173, %v1233
    %v1258 = vadd.f32 %v1174, %v1253
    %v1259 = vxor.u32 %v1255, 2147483648
    %v1260 = vmul.f32 %v1259, 1.442695
    %v1261 = vpow.pop %v1260
    %v1262 = vadd.f32 %v1261, 1.0
    %v1263 = vrcp.pop %v1262
    %v1264 = vmul.f32 %v1262, %v1263
    %v1265 = vsub.f32 1.0, %v1264
    %v1266 = vmul.f32 %v1263, %v1265
    %v1267 = vadd.f32 %v1263, %v1266
    %vm1268 = vweird.f32 %v1262
    %vm1269 = vweird.f32 %v1263
    %vm1270 = vmor %vm1268, %vm1269
    %v1271 = vsel %vm1270, %v1263, %v1267
    %v1272 = vand.u32 2147483647, %v1262
    %vm1273 = vcmp.eq.f32.partialorder %v1272, 8.507059e+37
    %v1274 = vand.u32 %v1262, 2147483648
    %v1275 = vor.u32 1.1754944e-38, %v1274
    %v1276 = vsel %vm1273, %v1275, %v1271
    %v1277 = vmul.f32 1.0, %v1276
    %v1278 = vxor.u32 %v1256, 2147483648
    %v1279 = vmul.f32 %v1278, 1.442695
    %v1280 = vpow.pop %v1279
    %v1281 = vadd.f32 %v1280, 1.0
    %v1282 = vrcp.pop %v1281
    %v1283 = vmul.f32 %v1281, %v1282
    %v1284 = vsub.f32 1.0, %v1283
    %v1285 = vmul.f32 %v1282, %v1284
    %v1286 = vadd.f32 %v1282, %v1285
    %vm1287 = vweird.f32 %v1281
    %vm1288 = vweird.f32 %v1282
    %vm1289 = vmor %vm1287, %vm1288
    %v1290 = vsel %vm1289, %v1282, %v1286
    %v1291 = vand.u32 2147483647, %v1281
    %vm1292 = vcmp.eq.f32.partialorder %v1291, 8.507059e+37
    %v1293 = vand.u32 %v1281, 2147483648
    %v1294 = vor.u32 1.1754944e-38, %v1293
    %v1295 = vsel %vm1292, %v1294, %v1290
    %v1296 = vmul.f32 1.0, %v1295
    %v1297 = vtanh.pop %v1257
    %v1298 = vxor.u32 %v1258, 2147483648
    %v1299 = vmul.f32 %v1298, 1.442695
    %v1300 = vpow.pop %v1299
    %v1301 = vadd.f32 %v1300, 1.0
    %v1302 = vrcp.pop %v1301
    %v1303 = vmul.f32 %v1301, %v1302
    %v1304 = vsub.f32 1.0, %v1303
    %v1305 = vmul.f32 %v1302, %v1304
    %v1306 = vadd.f32 %v1302, %v1305
    %vm1307 = vweird.f32 %v1301
    %vm1308 = vweird.f32 %v1302
    %vm1309 = vmor %vm1307, %vm1308
    %v1310 = vsel %vm1309, %v1302, %v1306
    %v1311 = vand.u32 2147483647, %v1301
    %vm1312 = vcmp.eq.f32.partialorder %v1311, 8.507059e+37
    %v1313 = vand.u32 %v1301, 2147483648
    %v1314 = vor.u32 1.1754944e-38, %v1313
    %v1315 = vsel %vm1312, %v1314, %v1310
    %v1316 = vmul.f32 1.0, %v1315
    %v1317 = vmul.f32 %v1296, %v1165
    %v1318 = vmul.f32 %v1277, %v1297
    %v1319 = vadd.f32 %v1317, %v1318
    %v1320 = vtanh.pop %v1319
    %v1321 = vmul.f32 %v1316, %v1320
    %s1322 = scalar_lea.vmem %s4, 40
    %1323 = vst [vmem:[%s1322] sm:$0xff] %v1321
    %s1324 = scalar_lea.vmem [#allocation2], 192
    %v1325 = vld [vmem:[%s1324] sm:$0xff]
    %v1326 = vld [vmem:[%s1324 + $0x8] sm:$0xff]
    %v1327 = vld [vmem:[%s1324 + $0x10] sm:$0xff]
    %v1328 = vld [vmem:[%s1324 + $0x18] sm:$0xff]
    %1329 = vmatpush.msra.mxu0 %v396
    %1330 = vmatpush.msra.mxu0 %v392
    %1331 = vmatpush.msra.mxu0 %v388
    %1332 = vmatpush.msra.mxu0 %v384
    %1333 = vmatpush.msra.mxu0 %v380
    %1334 = vmatpush.msra.mxu0 %v376
    %1335 = vmatpush.msra.mxu0 %v372
    %1336 = vmatpush.msra.mxu0 %v368
    %1337 = vmatpush.msra.mxu0 %v364
    %1338 = vmatpush.msra.mxu0 %v360
    %1339 = vmatpush.msra.mxu0 %v356
    %1340 = vmatpush.msra.mxu0 %v352
    %1341 = vmatpush.msra.mxu0 %v348
    %1342 = vmatpush.msra.mxu0 %v344
    %1343 = vmatpush.msra.mxu0 %v340
    %1344 = vmatpush.msra.mxu0 %v336
    %1345 = vmatmul.f32.gmra.mxu0 %v1321
    %v1346 = vpop.f32.mrf.mxu0
    %v1347 = vadd.f32 0.0, %v1346
    %1348 = vdwg.mxu0
    %1349 = vmatpush.msra.mxu0 %v397
    %1350 = vmatpush.msra.mxu0 %v393
    %1351 = vmatpush.msra.mxu0 %v389
    %1352 = vmatpush.msra.mxu0 %v385
    %1353 = vmatpush.msra.mxu0 %v381
    %1354 = vmatpush.msra.mxu0 %v377
    %1355 = vmatpush.msra.mxu0 %v373
    %1356 = vmatpush.msra.mxu0 %v369
    %1357 = vmatpush.msra.mxu0 %v365
    %1358 = vmatpush.msra.mxu0 %v361
    %1359 = vmatpush.msra.mxu0 %v357
    %1360 = vmatpush.msra.mxu0 %v353
    %1361 = vmatpush.msra.mxu0 %v349
    %1362 = vmatpush.msra.mxu0 %v345
    %1363 = vmatpush.msra.mxu0 %v341
    %1364 = vmatpush.msra.mxu0 %v337
    %1365 = vmatmul.f32.gmra.mxu0 %v1321
    %v1366 = vpop.f32.mrf.mxu0
    %v1367 = vadd.f32 0.0, %v1366
    %1368 = vdwg.mxu0
    %1369 = vmatpush.msra.mxu0 %v398
    %1370 = vmatpush.msra.mxu0 %v394
    %1371 = vmatpush.msra.mxu0 %v390
    %1372 = vmatpush.msra.mxu0 %v386
    %1373 = vmatpush.msra.mxu0 %v382
    %1374 = vmatpush.msra.mxu0 %v378
    %1375 = vmatpush.msra.mxu0 %v374
    %1376 = vmatpush.msra.mxu0 %v370
    %1377 = vmatpush.msra.mxu0 %v366
    %1378 = vmatpush.msra.mxu0 %v362
    %1379 = vmatpush.msra.mxu0 %v358
    %1380 = vmatpush.msra.mxu0 %v354
    %1381 = vmatpush.msra.mxu0 %v350
    %1382 = vmatpush.msra.mxu0 %v346
    %1383 = vmatpush.msra.mxu0 %v342
    %1384 = vmatpush.msra.mxu0 %v338
    %1385 = vmatmul.f32.gmra.mxu0 %v1321
    %v1386 = vpop.f32.mrf.mxu0
    %v1387 = vadd.f32 0.0, %v1386
    %1388 = vdwg.mxu0
    %1389 = vmatpush.msra.mxu0 %v399
    %1390 = vmatpush.msra.mxu0 %v395
    %1391 = vmatpush.msra.mxu0 %v391
    %1392 = vmatpush.msra.mxu0 %v387
    %1393 = vmatpush.msra.mxu0 %v383
    %1394 = vmatpush.msra.mxu0 %v379
    %1395 = vmatpush.msra.mxu0 %v375
    %1396 = vmatpush.msra.mxu0 %v371
    %1397 = vmatpush.msra.mxu0 %v367
    %1398 = vmatpush.msra.mxu0 %v363
    %1399 = vmatpush.msra.mxu0 %v359
    %1400 = vmatpush.msra.mxu0 %v355
    %1401 = vmatpush.msra.mxu0 %v351
    %1402 = vmatpush.msra.mxu0 %v347
    %1403 = vmatpush.msra.mxu0 %v343
    %1404 = vmatpush.msra.mxu0 %v339
    %1405 = vmatmul.f32.gmra.mxu0 %v1321
    %v1406 = vpop.f32.mrf.mxu0
    %v1407 = vadd.f32 0.0, %v1406
    %1408 = vdwg.mxu0
    %v1409 = vadd.f32 %v1325, %v1347
    %v1410 = vadd.f32 %v1326, %v1367
    %v1411 = vadd.f32 %v1327, %v1387
    %v1412 = vadd.f32 %v1328, %v1407
    %v1413 = vxor.u32 %v1409, 2147483648
    %v1414 = vmul.f32 %v1413, 1.442695
    %v1415 = vpow.pop %v1414
    %v1416 = vadd.f32 %v1415, 1.0
    %v1417 = vrcp.pop %v1416
    %v1418 = vmul.f32 %v1416, %v1417
    %v1419 = vsub.f32 1.0, %v1418
    %v1420 = vmul.f32 %v1417, %v1419
    %v1421 = vadd.f32 %v1417, %v1420
    %vm1422 = vweird.f32 %v1416
    %vm1423 = vweird.f32 %v1417
    %vm1424 = vmor %vm1422, %vm1423
    %v1425 = vsel %vm1424, %v1417, %v1421
    %v1426 = vand.u32 2147483647, %v1416
    %vm1427 = vcmp.eq.f32.partialorder %v1426, 8.507059e+37
    %v1428 = vand.u32 %v1416, 2147483648
    %v1429 = vor.u32 1.1754944e-38, %v1428
    %v1430 = vsel %vm1427, %v1429, %v1425
    %v1431 = vmul.f32 1.0, %v1430
    %v1432 = vxor.u32 %v1410, 2147483648
    %v1433 = vmul.f32 %v1432, 1.442695
    %v1434 = vpow.pop %v1433
    %v1435 = vadd.f32 %v1434, 1.0
    %v1436 = vrcp.pop %v1435
    %v1437 = vmul.f32 %v1435, %v1436
    %v1438 = vsub.f32 1.0, %v1437
    %v1439 = vmul.f32 %v1436, %v1438
    %v1440 = vadd.f32 %v1436, %v1439
    %vm1441 = vweird.f32 %v1435
    %vm1442 = vweird.f32 %v1436
    %vm1443 = vmor %vm1441, %vm1442
    %v1444 = vsel %vm1443, %v1436, %v1440
    %v1445 = vand.u32 2147483647, %v1435
    %vm1446 = vcmp.eq.f32.partialorder %v1445, 8.507059e+37
    %v1447 = vand.u32 %v1435, 2147483648
    %v1448 = vor.u32 1.1754944e-38, %v1447
    %v1449 = vsel %vm1446, %v1448, %v1444
    %v1450 = vmul.f32 1.0, %v1449
    %v1451 = vtanh.pop %v1411
    %v1452 = vxor.u32 %v1412, 2147483648
    %v1453 = vmul.f32 %v1452, 1.442695
    %v1454 = vpow.pop %v1453
    %v1455 = vadd.f32 %v1454, 1.0
    %v1456 = vrcp.pop %v1455
    %v1457 = vmul.f32 %v1455, %v1456
    %v1458 = vsub.f32 1.0, %v1457
    %v1459 = vmul.f32 %v1456, %v1458
    %v1460 = vadd.f32 %v1456, %v1459
    %vm1461 = vweird.f32 %v1455
    %vm1462 = vweird.f32 %v1456
    %vm1463 = vmor %vm1461, %vm1462
    %v1464 = vsel %vm1463, %v1456, %v1460
    %v1465 = vand.u32 2147483647, %v1455
    %vm1466 = vcmp.eq.f32.partialorder %v1465, 8.507059e+37
    %v1467 = vand.u32 %v1455, 2147483648
    %v1468 = vor.u32 1.1754944e-38, %v1467
    %v1469 = vsel %vm1466, %v1468, %v1464
    %v1470 = vmul.f32 1.0, %v1469
    %v1471 = vmul.f32 %v1450, %v1319
    %v1472 = vmul.f32 %v1431, %v1451
    %v1473 = vadd.f32 %v1471, %v1472
    %v1474 = vtanh.pop %v1473
    %v1475 = vmul.f32 %v1470, %v1474
    %s1476 = scalar_lea.vmem %s4, 48
    %1477 = vst [vmem:[%s1476] sm:$0xff] %v1475
    %s1478 = scalar_lea.vmem [#allocation2], 224
    %v1479 = vld [vmem:[%s1478] sm:$0xff]
    %v1480 = vld [vmem:[%s1478 + $0x8] sm:$0xff]
    %v1481 = vld [vmem:[%s1478 + $0x10] sm:$0xff]
    %v1482 = vld [vmem:[%s1478 + $0x18] sm:$0xff]
    %1483 = vmatpush.msra.mxu0 %v396
    %1484 = vmatpush.msra.mxu0 %v392
    %1485 = vmatpush.msra.mxu0 %v388
    %1486 = vmatpush.msra.mxu0 %v384
    %1487 = vmatpush.msra.mxu0 %v380
    %1488 = vmatpush.msra.mxu0 %v376
    %1489 = vmatpush.msra.mxu0 %v372
    %1490 = vmatpush.msra.mxu0 %v368
    %1491 = vmatpush.msra.mxu0 %v364
    %1492 = vmatpush.msra.mxu0 %v360
    %1493 = vmatpush.msra.mxu0 %v356
    %1494 = vmatpush.msra.mxu0 %v352
    %1495 = vmatpush.msra.mxu0 %v348
    %1496 = vmatpush.msra.mxu0 %v344
    %1497 = vmatpush.msra.mxu0 %v340
    %1498 = vmatpush.msra.mxu0 %v336
    %1499 = vmatmul.f32.gmra.mxu0 %v1475
    %v1500 = vpop.f32.mrf.mxu0
    %v1501 = vadd.f32 0.0, %v1500
    %1502 = vdwg.mxu0
    %1503 = vmatpush.msra.mxu0 %v397
    %1504 = vmatpush.msra.mxu0 %v393
    %1505 = vmatpush.msra.mxu0 %v389
    %1506 = vmatpush.msra.mxu0 %v385
    %1507 = vmatpush.msra.mxu0 %v381
    %1508 = vmatpush.msra.mxu0 %v377
    %1509 = vmatpush.msra.mxu0 %v373
    %1510 = vmatpush.msra.mxu0 %v369
    %1511 = vmatpush.msra.mxu0 %v365
    %1512 = vmatpush.msra.mxu0 %v361
    %1513 = vmatpush.msra.mxu0 %v357
    %1514 = vmatpush.msra.mxu0 %v353
    %1515 = vmatpush.msra.mxu0 %v349
    %1516 = vmatpush.msra.mxu0 %v345
    %1517 = vmatpush.msra.mxu0 %v341
    %1518 = vmatpush.msra.mxu0 %v337
    %1519 = vmatmul.f32.gmra.mxu0 %v1475
    %v1520 = vpop.f32.mrf.mxu0
    %v1521 = vadd.f32 0.0, %v1520
    %1522 = vdwg.mxu0
    %1523 = vmatpush.msra.mxu0 %v398
    %1524 = vmatpush.msra.mxu0 %v394
    %1525 = vmatpush.msra.mxu0 %v390
    %1526 = vmatpush.msra.mxu0 %v386
    %1527 = vmatpush.msra.mxu0 %v382
    %1528 = vmatpush.msra.mxu0 %v378
    %1529 = vmatpush.msra.mxu0 %v374
    %1530 = vmatpush.msra.mxu0 %v370
    %1531 = vmatpush.msra.mxu0 %v366
    %1532 = vmatpush.msra.mxu0 %v362
    %1533 = vmatpush.msra.mxu0 %v358
    %1534 = vmatpush.msra.mxu0 %v354
    %1535 = vmatpush.msra.mxu0 %v350
    %1536 = vmatpush.msra.mxu0 %v346
    %1537 = vmatpush.msra.mxu0 %v342
    %1538 = vmatpush.msra.mxu0 %v338
    %1539 = vmatmul.f32.gmra.mxu0 %v1475
    %v1540 = vpop.f32.mrf.mxu0
    %v1541 = vadd.f32 0.0, %v1540
    %1542 = vdwg.mxu0
    %1543 = vmatpush.msra.mxu0 %v399
    %1544 = vmatpush.msra.mxu0 %v395
    %1545 = vmatpush.msra.mxu0 %v391
    %1546 = vmatpush.msra.mxu0 %v387
    %1547 = vmatpush.msra.mxu0 %v383
    %1548 = vmatpush.msra.mxu0 %v379
    %1549 = vmatpush.msra.mxu0 %v375
    %1550 = vmatpush.msra.mxu0 %v371
    %1551 = vmatpush.msra.mxu0 %v367
    %1552 = vmatpush.msra.mxu0 %v363
    %1553 = vmatpush.msra.mxu0 %v359
    %1554 = vmatpush.msra.mxu0 %v355
    %1555 = vmatpush.msra.mxu0 %v351
    %1556 = vmatpush.msra.mxu0 %v347
    %1557 = vmatpush.msra.mxu0 %v343
    %1558 = vmatpush.msra.mxu0 %v339
    %1559 = vmatmul.f32.gmra.mxu0 %v1475
    %v1560 = vpop.f32.mrf.mxu0
    %v1561 = vadd.f32 0.0, %v1560
    %1562 = vdwg.mxu0
    %v1563 = vadd.f32 %v1479, %v1501
    %v1564 = vadd.f32 %v1480, %v1521
    %v1565 = vadd.f32 %v1481, %v1541
    %v1566 = vadd.f32 %v1482, %v1561
    %v1567 = vxor.u32 %v1563, 2147483648
    %v1568 = vmul.f32 %v1567, 1.442695
    %v1569 = vpow.pop %v1568
    %v1570 = vadd.f32 %v1569, 1.0
    %v1571 = vrcp.pop %v1570
    %v1572 = vmul.f32 %v1570, %v1571
    %v1573 = vsub.f32 1.0, %v1572
    %v1574 = vmul.f32 %v1571, %v1573
    %v1575 = vadd.f32 %v1571, %v1574
    %vm1576 = vweird.f32 %v1570
    %vm1577 = vweird.f32 %v1571
    %vm1578 = vmor %vm1576, %vm1577
    %v1579 = vsel %vm1578, %v1571, %v1575
    %v1580 = vand.u32 2147483647, %v1570
    %vm1581 = vcmp.eq.f32.partialorder %v1580, 8.507059e+37
    %v1582 = vand.u32 %v1570, 2147483648
    %v1583 = vor.u32 1.1754944e-38, %v1582
    %v1584 = vsel %vm1581, %v1583, %v1579
    %v1585 = vmul.f32 1.0, %v1584
    %v1586 = vxor.u32 %v1564, 2147483648
    %v1587 = vmul.f32 %v1586, 1.442695
    %v1588 = vpow.pop %v1587
    %v1589 = vadd.f32 %v1588, 1.0
    %v1590 = vrcp.pop %v1589
    %v1591 = vmul.f32 %v1589, %v1590
    %v1592 = vsub.f32 1.0, %v1591
    %v1593 = vmul.f32 %v1590, %v1592
    %v1594 = vadd.f32 %v1590, %v1593
    %vm1595 = vweird.f32 %v1589
    %vm1596 = vweird.f32 %v1590
    %vm1597 = vmor %vm1595, %vm1596
    %v1598 = vsel %vm1597, %v1590, %v1594
    %v1599 = vand.u32 2147483647, %v1589
    %vm1600 = vcmp.eq.f32.partialorder %v1599, 8.507059e+37
    %v1601 = vand.u32 %v1589, 2147483648
    %v1602 = vor.u32 1.1754944e-38, %v1601
    %v1603 = vsel %vm1600, %v1602, %v1598
    %v1604 = vmul.f32 1.0, %v1603
    %v1605 = vtanh.pop %v1565
    %v1606 = vxor.u32 %v1566, 2147483648
    %v1607 = vmul.f32 %v1606, 1.442695
    %v1608 = vpow.pop %v1607
    %v1609 = vadd.f32 %v1608, 1.0
    %v1610 = vrcp.pop %v1609
    %v1611 = vmul.f32 %v1609, %v1610
    %v1612 = vsub.f32 1.0, %v1611
    %v1613 = vmul.f32 %v1610, %v1612
    %v1614 = vadd.f32 %v1610, %v1613
    %vm1615 = vweird.f32 %v1609
    %vm1616 = vweird.f32 %v1610
    %vm1617 = vmor %vm1615, %vm1616
    %v1618 = vsel %vm1617, %v1610, %v1614
    %v1619 = vand.u32 2147483647, %v1609
    %vm1620 = vcmp.eq.f32.partialorder %v1619, 8.507059e+37
    %v1621 = vand.u32 %v1609, 2147483648
    %v1622 = vor.u32 1.1754944e-38, %v1621
    %v1623 = vsel %vm1620, %v1622, %v1618
    %v1624 = vmul.f32 1.0, %v1623
    %v1625 = vmul.f32 %v1604, %v1473
    %v1626 = vmul.f32 %v1585, %v1605
    %v1627 = vadd.f32 %v1625, %v1626
    %v1628 = vtanh.pop %v1627
    %v1629 = vmul.f32 %v1624, %v1628
    %s1630 = scalar_lea.vmem %s4, 56
    %1631 = vst [vmem:[%s1630] sm:$0xff] %v1629
    %1632 = vst [vmem:[%s5] sm:$0xff] %v1629
    %1633 = vst [vmem:[%s6] sm:$0xff] %v1627
    // Predicated region
    $region30: #{encoder_forward.2} parent=1 // pred_check
      _
    $region31: #{encoder_forward.2} parent=1 // pred_check_branch
      %1635 = sbr.rel (0) target = $region33
    $region32: #{encoder_forward.2} parent=1 // pred_region
      _
    $region33: #{encoder_forward.2} parent=1 // pred_fallthru
      _
    // Predicated region
    $region34: #{encoder_forward.2} parent=1 // pred_check
      _
    $region35: #{encoder_forward.2} parent=1 // pred_check_branch
      %1637 = sbr.rel (0) target = $region37
    $region36: #{encoder_forward.2} parent=1 // pred_region
      _
    $region37: #{encoder_forward.2} parent=1 // pred_fallthru
      _
    // Predicated region
    $region38: #{encoder_forward.2} parent=1 // pred_check
      _
    $region39: #{encoder_forward.2} parent=1 // pred_check_branch
      %1639 = sbr.rel (0) target = $region41
    $region40: #{encoder_forward.2} parent=1 // pred_region
      _
    $region41: #{encoder_forward.2} parent=1 // pred_fallthru
      _
    // Predicated region
    $region42: #{encoder_forward.2} parent=1 // pred_check
      _
    $region43: #{encoder_forward.2} parent=1 // pred_check_branch
      %1641 = sbr.rel (0) target = $region45
    $region44: #{encoder_forward.2} parent=1 // pred_region
      _
    $region45: #{encoder_forward.2} parent=1 // pred_fallthru
      _
    // Predicated region
    $region46: #{encoder_forward.2} parent=1 // pred_check
      _
    $region47: #{encoder_forward.2} parent=1 // pred_check_branch
      %1643 = sbr.rel (0) target = $region49
    $region48: #{encoder_forward.2} parent=1 // pred_region
      _
    $region49: #{encoder_forward.2} parent=1 // pred_fallthru
      _
    // Predicated region
    $region50: #{encoder_forward.2} parent=1 // pred_check
      _
    $region51: #{encoder_forward.2} parent=1 // pred_check_branch
      %1645 = sbr.rel (0) target = $region53
    $region52: #{encoder_forward.2} parent=1 // pred_region
      _
    $region53: #{encoder_forward.2} parent=1 // pred_fallthru
      _
    %1646 = vsyncpa [#allocation4], 1
    %1647 = vsyncpa [#allocation6], 1

</llo_original>
